<compile_context>
chip_gen: v7x
topology: tpu7x:2x2x1
jax: 0.10.0
libtpu: 0.0.40
codegen_flags: <defaults>
</compile_context>

<pallas_src>
import math

import jax
import jax.numpy as jnp
from jax.experimental import pallas as pl
from jax.experimental.pallas import tpu as pltpu


def _periodic_act_kernel(x_ref, freq2_ref, phase_ref, w_ref, o_ref):
    # x_ref:     (TM_P, P)      P logical feature scalars per physical row (f32)
    # freq2_ref: (1, 2Kp)       [2*pi*f | 2*pi*f], zero-padded        (f32)
    # phase_ref: (1, 2Kp)       [0 | -pi/2]                           (f32)
    # w_ref:     (2Kp, D)       [W_cos ; W_sin] rows, zero-padded rows
    # o_ref:     (TM_P, P*D)    P logical output rows packed along lanes
    freq2 = freq2_ref[...]                      # (1, 2Kp)
    phase = phase_ref[...]                      # (1, 2Kp)
    w = w_ref[...]                              # (2Kp, D)
    d = w.shape[1]
    p_pack = x_ref.shape[1]
    bf16_trig = w.dtype == jnp.bfloat16         # opt-in EUP fast path

    xb = x_ref[...].astype(jnp.float32)         # (TM_P, P)
    for p in range(p_pack):                     # short static unrolled loop
        # One full-lane-width cos pass produces cos|sin halves together.
        phi = xb[:, p:p + 1] * freq2 + phase    # (TM_P, 2Kp) f32
        if bf16_trig:
            phi = phi.astype(jnp.bfloat16)
        feats = jnp.cos(phi)                    # (TM_P, 2Kp)
        out = jnp.dot(feats.astype(w.dtype), w,
                      preferred_element_type=jnp.float32)   # (TM_P, D)
        # Direct slice store: no lane-concat temp for the packed output.
        o_ref[:, p * d:(p + 1) * d] = jnp.maximum(out, 0.0).astype(o_ref.dtype)


def periodic_act_embeddings(x, freq_weight, linear_weight, *, tile_m=8192,
                            p_pack=8, matmul_dtype=jnp.float32,
                            out_dtype=jnp.float32):
    """Pallas forward for PeriodicActEmbeddings.

    Args:
      x: (..., F) or (..., F, 1) float array (trailing size-1 axis squeezed,
         matching torch's x.squeeze(-1)).
      freq_weight: (K,) periodic frequencies (_Periodic.weight).
      linear_weight: (D, 2K) torch nn.Linear weight (out_features, in_features).
      tile_m: logical rows per grid step (rounded to a multiple of 8*p_pack).
      p_pack: logical rows packed per physical row (output lane width p_pack*D).
      matmul_dtype: feature/weight dtype for the MXU. float32 default is
        bit-faithful to the torch module; jnp.bfloat16 is a speed knob
        (also enables the bf16 cos fast path on v6e/v7x).
      out_dtype: output dtype. float32 default matches torch; bf16 halves the
        dominant HBM write traffic on memory-bound chips.

    Returns:
      (..., F, D) embeddings.
    """
    if x.shape[-1] == 1:
        x = jnp.squeeze(x, axis=-1)
    lead_shape = x.shape                         # (..., F)
    k = freq_weight.shape[0]
    d = linear_weight.shape[0]
    assert linear_weight.shape[1] == 2 * k

    m = int(math.prod(lead_shape)) if lead_shape else 1

    # Tile granularity: p_pack logical rows share one physical row and the
    # physical sublane count must be a multiple of 8.
    gran = 8 * p_pack
    tile_m = max(gran, (int(tile_m) // gran) * gran)
    tile_m = min(tile_m, pl.cdiv(m, gran) * gran)      # don't over-pad tiny inputs
    # v7x megacore: if there is enough work for two tiles, never collapse to a
    # single grid step so the "parallel" axis shards across both TensorCores.
    if pl.cdiv(m, tile_m) == 1 and m > gran:
        tile_m = pl.cdiv(pl.cdiv(m, 2), gran) * gran
    m_pad = pl.cdiv(m, tile_m) * tile_m

    x_flat = x.reshape(-1).astype(jnp.float32)
    if m_pad != m:
        x_flat = jnp.pad(x_flat, (0, m_pad - m))
    xp = x_flat.reshape(m_pad // p_pack, p_pack)       # P logical rows / phys row

    # Pad K so 2*Kp is a multiple of 128.  Fold 2*pi into the frequencies once
    # and build the fused-cos operands: freq2 = [f|f], phase = [0|-pi/2].
    kp = ((k + 63) // 64) * 64
    freq_pad = jnp.pad((2.0 * math.pi) * freq_weight.astype(jnp.float32),
                       (0, kp - k))
    freq2 = jnp.concatenate([freq_pad, freq_pad]).reshape(1, 2 * kp)
    phase = jnp.concatenate(
        [jnp.zeros((kp,), jnp.float32),
         jnp.full((kp,), -0.5 * math.pi, jnp.float32)]).reshape(1, 2 * kp)

    # Weight: (D, 2K) -> transpose -> split cos/sin halves -> zero-pad ROWS so
    # padded lanes (cos->1, sin->0) contribute nothing.
    w_t = linear_weight.astype(jnp.float32).T           # (2K, D)
    w_cos = jnp.pad(w_t[:k], ((0, kp - k), (0, 0)))     # (Kp, D)
    w_sin = jnp.pad(w_t[k:], ((0, kp - k), (0, 0)))     # (Kp, D)
    w_p = jnp.concatenate([w_cos, w_sin], axis=0).astype(matmul_dtype)  # (2Kp,D)

    tm_p = tile_m // p_pack
    grid = (m_pad // tile_m,)

    # Explicit VMEM budget: double-buffered blocks + in-kernel temps + headroom.
    itemsize_out = jnp.dtype(out_dtype).itemsize
    itemsize_w = jnp.dtype(matmul_dtype).itemsize
    block_bytes = (tm_p * 128 * 4                        # lane-padded x block
                   + tm_p * p_pack * d * itemsize_out    # output block
                   + 2 * kp * max(d, 128) * itemsize_w   # weight block
                   + 2 * 8 * 2 * kp * 4)                 # freq2 + phase
    temps_bytes = 8 * tm_p * 128 * 4                     # phi/feats/out temps
    vmem_limit = int(min(max(2 * block_bytes + temps_bytes + (2 << 20),
                             16 << 20), 40 << 20))

    out_packed = pl.pallas_call(
        _periodic_act_kernel,
        out_shape=jax.ShapeDtypeStruct((m_pad // p_pack, p_pack * d), out_dtype),
        grid_spec=pltpu.PrefetchScalarGridSpec(
            num_scalar_prefetch=0,
            grid=grid,
            in_specs=[
                pl.BlockSpec((tm_p, p_pack), lambda i: (i, 0)),
                pl.BlockSpec((1, 2 * kp), lambda i: (0, 0)),
                pl.BlockSpec((1, 2 * kp), lambda i: (0, 0)),
                pl.BlockSpec((2 * kp, d), lambda i: (0, 0)),
            ],
            out_specs=pl.BlockSpec((tm_p, p_pack * d), lambda i: (i, 0)),
        ),
        compiler_params=pltpu.CompilerParams(
            dimension_semantics=("parallel",),
            vmem_limit_bytes=vmem_limit),
    )(xp, freq2, phase, w_p)

    # (m_pad/P, P*D) row-major is bit-identical to (m_pad, D) row-major:
    # free wrapper reshape, then drop padded tail rows (must keep the [:m]!).
    out = out_packed.reshape(m_pad, d)[:m].reshape(*lead_shape, d)
    return out


def _reference(x, freq_weight, linear_weight):
    if x.shape[-1] == 1:
        x = jnp.squeeze(x, axis=-1)
    phi = 2.0 * math.pi * freq_weight * x[..., None]
    feats = jnp.concatenate([jnp.cos(phi), jnp.sin(phi)], axis=-1)
    out = jnp.einsum("...k,dk->...d", feats, linear_weight)
    return jnp.maximum(out, 0.0)


if __name__ == "__main__":
    # Module hyperparameters (defaults of PeriodicActEmbeddings).
    d_embedding = 64
    n_frequencies = 48
    frequency_init_scale = 0.01  # sigma

    batch_size = 2
    n_features = 4

    key = jax.random.PRNGKey(0)
    k_x, k_freq, k_lin, k_x2 = jax.random.split(key, 4)

    # Input: (B, F, 1) -> squeeze(-1) inside forward, as in the torch module.
    x = jax.random.normal(k_x, (batch_size, n_features, 1), dtype=jnp.float32)

    # _Periodic.weight: trunc_normal(0, sigma, a=-3*sigma, b=3*sigma)
    freq_weight = (frequency_init_scale *
                   jax.random.truncated_normal(
                       k_freq, -3.0, 3.0, (n_frequencies,), dtype=jnp.float32))

    # nn.Linear(2K, D, bias=False) default init, weight shape (D, 2K).
    fan_in = 2 * n_frequencies
    bound = 1.0 / math.sqrt(fan_in)
    linear_weight = jax.random.uniform(
        k_lin, (d_embedding, 2 * n_frequencies),
        minval=-bound, maxval=bound, dtype=jnp.float32)

    ref = _reference(x, freq_weight, linear_weight)

    # Default (f32 MXU) path: near-bit-exact vs the torch module.
    out_f32 = periodic_act_embeddings(x, freq_weight, linear_weight)
    out_f32 = jax.block_until_ready(out_f32)
    assert out_f32.shape == (batch_size, n_features, d_embedding), out_f32.shape
    assert jnp.allclose(out_f32, ref, atol=1e-4, rtol=1e-4), "f32 mismatch"

    # Opt-in fast path: bf16 MXU operands + bf16 cos + bf16 output.
    out_bf16 = periodic_act_embeddings(x, freq_weight, linear_weight,
                                       matmul_dtype=jnp.bfloat16,
                                       out_dtype=jnp.bfloat16)
    out_bf16 = jax.block_until_ready(out_bf16)
    assert out_bf16.shape == (batch_size, n_features, d_embedding)
    assert jnp.allclose(out_bf16.astype(jnp.float32), ref,
                        atol=5e-2, rtol=5e-2), "bf16 mismatch"

    # Multi-step grid + padded-row path: odd M, explicit small tile.
    x_big = jax.random.normal(k_x2, (7, 33), dtype=jnp.float32)
    ref_big = _reference(x_big, freq_weight, linear_weight)
    out_big = periodic_act_embeddings(x_big, freq_weight, linear_weight,
                                      tile_m=128)
    out_big = jax.block_until_ready(out_big)
    assert out_big.shape == (7, 33, d_embedding), out_big.shape
    assert jnp.allclose(out_big, ref_big, atol=1e-4, rtol=1e-4), "tiled mismatch"

    # Same data via the default tile path (exercises the auto >=2-step split).
    out_auto = periodic_act_embeddings(x_big, freq_weight, linear_weight)
    out_auto = jax.block_until_ready(out_auto)
    assert jnp.allclose(out_auto, ref_big, atol=1e-4, rtol=1e-4), "auto mismatch"

    print("KERNEL_OK")
</pallas_src>

<mosaic_0001>
module attributes {stable_mosaic.version = 11 : i64} {
  func.func @_periodic_act_kernel(%arg0: i32, %arg1: memref<8x8xf32, #tpu.memory_space<vmem>>, %arg2: memref<1x128xf32, #tpu.memory_space<vmem>>, %arg3: memref<1x128xf32, #tpu.memory_space<vmem>>, %arg4: memref<128x64xf32, #tpu.memory_space<vmem>>, %arg5: memref<8x512xf32, #tpu.memory_space<vmem>>) attributes {dimension_semantics = [#tpu.dimension_semantics<parallel>], iteration_bounds = array<i64: 1>, scalar_prefetch = 0 : i64, scratch_operands = 0 : i64, tpu.core_type = #tpu.core_type<tc>, window_params = [{transform_indices = @transform_0, window_bounds = array<i64: 8, 8>}, {pipeline_mode = #tpu.pipeline_mode<synchronous>, transform_indices = @transform_1, window_bounds = array<i64: 1, 128>}, {pipeline_mode = #tpu.pipeline_mode<synchronous>, transform_indices = @transform_2, window_bounds = array<i64: 1, 128>}, {pipeline_mode = #tpu.pipeline_mode<synchronous>, transform_indices = @transform_3, window_bounds = array<i64: 128, 64>}, {transform_indices = @transform_4, window_bounds = array<i64: 8, 512>}]} {
    %c0 = arith.constant 0 : index
    %c0_0 = arith.constant 0 : index
    %0 = vector.load %arg2[%c0, %c0_0] : memref<1x128xf32, #tpu.memory_space<vmem>>, vector<1x128xf32>
    %c0_1 = arith.constant 0 : index
    %c0_2 = arith.constant 0 : index
    %1 = vector.load %arg3[%c0_1, %c0_2] : memref<1x128xf32, #tpu.memory_space<vmem>>, vector<1x128xf32>
    %c0_3 = arith.constant 0 : index
    %c0_4 = arith.constant 0 : index
    %2 = vector.load %arg4[%c0_3, %c0_4] : memref<128x64xf32, #tpu.memory_space<vmem>>, vector<128x64xf32>
    %c0_5 = arith.constant 0 : index
    %c0_6 = arith.constant 0 : index
    %3 = vector.load %arg1[%c0_5, %c0_6] : memref<8x8xf32, #tpu.memory_space<vmem>>, vector<8x8xf32>
    %4 = vector.extract_strided_slice %3 {offsets = [0, 0], sizes = [8, 1], strides = [1, 1]} : vector<8x8xf32> to vector<8x1xf32>
    %5 = vector.broadcast %4 : vector<8x1xf32> to vector<8x128xf32>
    %6 = vector.broadcast %0 : vector<1x128xf32> to vector<8x128xf32>
    %7 = arith.mulf %5, %6 : vector<8x128xf32>
    %8 = vector.broadcast %1 : vector<1x128xf32> to vector<8x128xf32>
    %9 = arith.addf %7, %8 : vector<8x128xf32>
    %10 = math.cos %9 : vector<8x128xf32>
    %cst = arith.constant dense<0.000000e+00> : vector<8x64xf32>
    %11 = tpu.matmul %10, %2, %cst {dimension_numbers = #tpu.dot_dimension_numbers<[1], [0], [0], [1], [0, 0, 1, 1], [], []>} : vector<8x128xf32>, vector<128x64xf32>, vector<8x64xf32> -> vector<8x64xf32>
    %cst_7 = arith.constant 0.000000e+00 : f32
    %12 = vector.broadcast %cst_7 : f32 to vector<8x64xf32>
    %13 = arith.maximumf %11, %12 : vector<8x64xf32>
    %c0_8 = arith.constant 0 : index
    %c0_9 = arith.constant 0 : index
    %14 = vector.load %arg5[%c0_8, %c0_9] : memref<8x512xf32, #tpu.memory_space<vmem>>, vector<8x64xf32>
    tpu.vector_store %arg5[%c0_8, %c0_9], %13 {strides = array<i32>} : memref<8x512xf32, #tpu.memory_space<vmem>>, vector<8x64xf32>,
    %15 = vector.extract_strided_slice %3 {offsets = [0, 1], sizes = [8, 1], strides = [1, 1]} : vector<8x8xf32> to vector<8x1xf32>
    %16 = vector.broadcast %15 : vector<8x1xf32> to vector<8x128xf32>
    %17 = vector.broadcast %0 : vector<1x128xf32> to vector<8x128xf32>
    %18 = arith.mulf %16, %17 : vector<8x128xf32>
    %19 = vector.broadcast %1 : vector<1x128xf32> to vector<8x128xf32>
    %20 = arith.addf %18, %19 : vector<8x128xf32>
    %21 = math.cos %20 : vector<8x128xf32>
    %cst_10 = arith.constant dense<0.000000e+00> : vector<8x64xf32>
    %22 = tpu.matmul %21, %2, %cst_10 {dimension_numbers = #tpu.dot_dimension_numbers<[1], [0], [0], [1], [0, 0, 1, 1], [], []>} : vector<8x128xf32>, vector<128x64xf32>, vector<8x64xf32> -> vector<8x64xf32>
    %cst_11 = arith.constant 0.000000e+00 : f32
    %23 = vector.broadcast %cst_11 : f32 to vector<8x64xf32>
    %24 = arith.maximumf %22, %23 : vector<8x64xf32>
    %c0_12 = arith.constant 0 : index
    %c64 = arith.constant 64 : index
    %25 = vector.load %arg5[%c0_12, %c64] : memref<8x512xf32, #tpu.memory_space<vmem>>, vector<8x64xf32>
    tpu.vector_store %arg5[%c0_12, %c64], %24 {strides = array<i32>} : memref<8x512xf32, #tpu.memory_space<vmem>>, vector<8x64xf32>,
    %26 = vector.extract_strided_slice %3 {offsets = [0, 2], sizes = [8, 1], strides = [1, 1]} : vector<8x8xf32> to vector<8x1xf32>
    %27 = vector.broadcast %26 : vector<8x1xf32> to vector<8x128xf32>
    %28 = vector.broadcast %0 : vector<1x128xf32> to vector<8x128xf32>
    %29 = arith.mulf %27, %28 : vector<8x128xf32>
    %30 = vector.broadcast %1 : vector<1x128xf32> to vector<8x128xf32>
    %31 = arith.addf %29, %30 : vector<8x128xf32>
    %32 = math.cos %31 : vector<8x128xf32>
    %cst_13 = arith.constant dense<0.000000e+00> : vector<8x64xf32>
    %33 = tpu.matmul %32, %2, %cst_13 {dimension_numbers = #tpu.dot_dimension_numbers<[1], [0], [0], [1], [0, 0, 1, 1], [], []>} : vector<8x128xf32>, vector<128x64xf32>, vector<8x64xf32> -> vector<8x64xf32>
    %cst_14 = arith.constant 0.000000e+00 : f32
    %34 = vector.broadcast %cst_14 : f32 to vector<8x64xf32>
    %35 = arith.maximumf %33, %34 : vector<8x64xf32>
    %c0_15 = arith.constant 0 : index
    %c128 = arith.constant 128 : index
    %36 = vector.load %arg5[%c0_15, %c128] : memref<8x512xf32, #tpu.memory_space<vmem>>, vector<8x64xf32>
    tpu.vector_store %arg5[%c0_15, %c128], %35 {strides = array<i32>} : memref<8x512xf32, #tpu.memory_space<vmem>>, vector<8x64xf32>,
    %37 = vector.extract_strided_slice %3 {offsets = [0, 3], sizes = [8, 1], strides = [1, 1]} : vector<8x8xf32> to vector<8x1xf32>
    %38 = vector.broadcast %37 : vector<8x1xf32> to vector<8x128xf32>
    %39 = vector.broadcast %0 : vector<1x128xf32> to vector<8x128xf32>
    %40 = arith.mulf %38, %39 : vector<8x128xf32>
    %41 = vector.broadcast %1 : vector<1x128xf32> to vector<8x128xf32>
    %42 = arith.addf %40, %41 : vector<8x128xf32>
    %43 = math.cos %42 : vector<8x128xf32>
    %cst_16 = arith.constant dense<0.000000e+00> : vector<8x64xf32>
    %44 = tpu.matmul %43, %2, %cst_16 {dimension_numbers = #tpu.dot_dimension_numbers<[1], [0], [0], [1], [0, 0, 1, 1], [], []>} : vector<8x128xf32>, vector<128x64xf32>, vector<8x64xf32> -> vector<8x64xf32>
    %cst_17 = arith.constant 0.000000e+00 : f32
    %45 = vector.broadcast %cst_17 : f32 to vector<8x64xf32>
    %46 = arith.maximumf %44, %45 : vector<8x64xf32>
    %c0_18 = arith.constant 0 : index
    %c192 = arith.constant 192 : index
    %47 = vector.load %arg5[%c0_18, %c192] : memref<8x512xf32, #tpu.memory_space<vmem>>, vector<8x64xf32>
    tpu.vector_store %arg5[%c0_18, %c192], %46 {strides = array<i32>} : memref<8x512xf32, #tpu.memory_space<vmem>>, vector<8x64xf32>,
    %48 = vector.extract_strided_slice %3 {offsets = [0, 4], sizes = [8, 1], strides = [1, 1]} : vector<8x8xf32> to vector<8x1xf32>
    %49 = vector.broadcast %48 : vector<8x1xf32> to vector<8x128xf32>
    %50 = vector.broadcast %0 : vector<1x128xf32> to vector<8x128xf32>
    %51 = arith.mulf %49, %50 : vector<8x128xf32>
    %52 = vector.broadcast %1 : vector<1x128xf32> to vector<8x128xf32>
    %53 = arith.addf %51, %52 : vector<8x128xf32>
    %54 = math.cos %53 : vector<8x128xf32>
    %cst_19 = arith.constant dense<0.000000e+00> : vector<8x64xf32>
    %55 = tpu.matmul %54, %2, %cst_19 {dimension_numbers = #tpu.dot_dimension_numbers<[1], [0], [0], [1], [0, 0, 1, 1], [], []>} : vector<8x128xf32>, vector<128x64xf32>, vector<8x64xf32> -> vector<8x64xf32>
    %cst_20 = arith.constant 0.000000e+00 : f32
    %56 = vector.broadcast %cst_20 : f32 to vector<8x64xf32>
    %57 = arith.maximumf %55, %56 : vector<8x64xf32>
    %c0_21 = arith.constant 0 : index
    %c256 = arith.constant 256 : index
    %58 = vector.load %arg5[%c0_21, %c256] : memref<8x512xf32, #tpu.memory_space<vmem>>, vector<8x64xf32>
    tpu.vector_store %arg5[%c0_21, %c256], %57 {strides = array<i32>} : memref<8x512xf32, #tpu.memory_space<vmem>>, vector<8x64xf32>,
    %59 = vector.extract_strided_slice %3 {offsets = [0, 5], sizes = [8, 1], strides = [1, 1]} : vector<8x8xf32> to vector<8x1xf32>
    %60 = vector.broadcast %59 : vector<8x1xf32> to vector<8x128xf32>
    %61 = vector.broadcast %0 : vector<1x128xf32> to vector<8x128xf32>
    %62 = arith.mulf %60, %61 : vector<8x128xf32>
    %63 = vector.broadcast %1 : vector<1x128xf32> to vector<8x128xf32>
    %64 = arith.addf %62, %63 : vector<8x128xf32>
    %65 = math.cos %64 : vector<8x128xf32>
    %cst_22 = arith.constant dense<0.000000e+00> : vector<8x64xf32>
    %66 = tpu.matmul %65, %2, %cst_22 {dimension_numbers = #tpu.dot_dimension_numbers<[1], [0], [0], [1], [0, 0, 1, 1], [], []>} : vector<8x128xf32>, vector<128x64xf32>, vector<8x64xf32> -> vector<8x64xf32>
    %cst_23 = arith.constant 0.000000e+00 : f32
    %67 = vector.broadcast %cst_23 : f32 to vector<8x64xf32>
    %68 = arith.maximumf %66, %67 : vector<8x64xf32>
    %c0_24 = arith.constant 0 : index
    %c320 = arith.constant 320 : index
    %69 = vector.load %arg5[%c0_24, %c320] : memref<8x512xf32, #tpu.memory_space<vmem>>, vector<8x64xf32>
    tpu.vector_store %arg5[%c0_24, %c320], %68 {strides = array<i32>} : memref<8x512xf32, #tpu.memory_space<vmem>>, vector<8x64xf32>,
    %70 = vector.extract_strided_slice %3 {offsets = [0, 6], sizes = [8, 1], strides = [1, 1]} : vector<8x8xf32> to vector<8x1xf32>
    %71 = vector.broadcast %70 : vector<8x1xf32> to vector<8x128xf32>
    %72 = vector.broadcast %0 : vector<1x128xf32> to vector<8x128xf32>
    %73 = arith.mulf %71, %72 : vector<8x128xf32>
    %74 = vector.broadcast %1 : vector<1x128xf32> to vector<8x128xf32>
    %75 = arith.addf %73, %74 : vector<8x128xf32>
    %76 = math.cos %75 : vector<8x128xf32>
    %cst_25 = arith.constant dense<0.000000e+00> : vector<8x64xf32>
    %77 = tpu.matmul %76, %2, %cst_25 {dimension_numbers = #tpu.dot_dimension_numbers<[1], [0], [0], [1], [0, 0, 1, 1], [], []>} : vector<8x128xf32>, vector<128x64xf32>, vector<8x64xf32> -> vector<8x64xf32>
    %cst_26 = arith.constant 0.000000e+00 : f32
    %78 = vector.broadcast %cst_26 : f32 to vector<8x64xf32>
    %79 = arith.maximumf %77, %78 : vector<8x64xf32>
    %c0_27 = arith.constant 0 : index
    %c384 = arith.constant 384 : index
    %80 = vector.load %arg5[%c0_27, %c384] : memref<8x512xf32, #tpu.memory_space<vmem>>, vector<8x64xf32>
    tpu.vector_store %arg5[%c0_27, %c384], %79 {strides = array<i32>} : memref<8x512xf32, #tpu.memory_space<vmem>>, vector<8x64xf32>,
    %81 = vector.extract_strided_slice %3 {offsets = [0, 7], sizes = [8, 1], strides = [1, 1]} : vector<8x8xf32> to vector<8x1xf32>
    %82 = vector.broadcast %81 : vector<8x1xf32> to vector<8x128xf32>
    %83 = vector.broadcast %0 : vector<1x128xf32> to vector<8x128xf32>
    %84 = arith.mulf %82, %83 : vector<8x128xf32>
    %85 = vector.broadcast %1 : vector<1x128xf32> to vector<8x128xf32>
    %86 = arith.addf %84, %85 : vector<8x128xf32>
    %87 = math.cos %86 : vector<8x128xf32>
    %cst_28 = arith.constant dense<0.000000e+00> : vector<8x64xf32>
    %88 = tpu.matmul %87, %2, %cst_28 {dimension_numbers = #tpu.dot_dimension_numbers<[1], [0], [0], [1], [0, 0, 1, 1], [], []>} : vector<8x128xf32>, vector<128x64xf32>, vector<8x64xf32> -> vector<8x64xf32>
    %cst_29 = arith.constant 0.000000e+00 : f32
    %89 = vector.broadcast %cst_29 : f32 to vector<8x64xf32>
    %90 = arith.maximumf %88, %89 : vector<8x64xf32>
    %c0_30 = arith.constant 0 : index
    %c448 = arith.constant 448 : index
    %91 = vector.load %arg5[%c0_30, %c448] : memref<8x512xf32, #tpu.memory_space<vmem>>, vector<8x64xf32>
    tpu.vector_store %arg5[%c0_30, %c448], %90 {strides = array<i32>} : memref<8x512xf32, #tpu.memory_space<vmem>>, vector<8x64xf32>,
    return
  }
  func.func @transform_0(%arg0: i32) -> (i32, i32) {
    %c0_i32 = arith.constant 0 : i32
    %c0_i32_0 = arith.constant 0 : i32
    return %arg0, %c0_i32 : i32, i32
  }
  func.func @transform_1(%arg0: i32) -> (i32, i32) {
    %c0_i32 = arith.constant 0 : i32
    %c0_i32_0 = arith.constant 0 : i32
    %c0_i32_1 = arith.constant 0 : i32
    return %c0_i32, %c0_i32_0 : i32, i32
  }
  func.func @transform_2(%arg0: i32) -> (i32, i32) {
    %c0_i32 = arith.constant 0 : i32
    %c0_i32_0 = arith.constant 0 : i32
    %c0_i32_1 = arith.constant 0 : i32
    return %c0_i32, %c0_i32_0 : i32, i32
  }
  func.func @transform_3(%arg0: i32) -> (i32, i32) {
    %c0_i32 = arith.constant 0 : i32
    %c0_i32_0 = arith.constant 0 : i32
    %c0_i32_1 = arith.constant 0 : i32
    return %c0_i32, %c0_i32_0 : i32, i32
  }
  func.func @transform_4(%arg0: i32) -> (i32, i32) {
    %c0_i32 = arith.constant 0 : i32
    %c0_i32_0 = arith.constant 0 : i32
    return %arg0, %c0_i32 : i32, i32
  }
}

</mosaic_0001>

<llo_original>
// kernel: tpu_custom_call.1
$region0: #{tpu_custom_call.1}
  #allocation0 [shape = 'u32[]', space=smem, size = 0x4, offset = 0x4, fixed_abs, tag = 'smem constant byte address 0x4 - core index']
  #allocation1 [shape = 'u32[144,128]{1,0:T(1,128)}', space=vmem, size = 0x12000, scoped, tag = 'internal scratch']
  %s0 = inlined_call_operand.vmem [shape: f32[8,8], index: 0, kind: input, shape index: {}]
  %s1 = inlined_call_operand.vmem [shape: f32[1,128], index: 1, kind: input, shape index: {}]
  %s2 = inlined_call_operand.vmem [shape: f32[1,128], index: 2, kind: input, shape index: {}]
  %s3 = inlined_call_operand.vmem [shape: f32[128,64], index: 3, kind: input, shape index: {}]
  %s4 = inlined_call_operand.hbm [shape: f32[8,512], index: 4, kind: output, shape index: {}]
  %s5 = sld [smem:[#allocation0]]
  $region26: #{tpu_custom_call.1} parent=0
    _
  %s7 = ssub.s32 1, %s5
  %s8 = scalar_select 0, %s7, %s5
  $region1: #{tpu_custom_call.1} parent=0
    #allocation2 [shape = 'u8[16384]{0}', space=vmem, size = 0x4000, scoped, tag = 'output window, operand 0, single buffered']
    #allocation3 [shape = 's32[1]{0}', space=sflag, size = 0x4, scoped, tag = 'scoped memory for tpu_custom_call.1']
    %9 = vsyncpa [#allocation3], 0
    // Predicated region
    $region2: #{tpu_custom_call.1} parent=1 // pred_check
      _
    $region3: #{tpu_custom_call.1} parent=1 // pred_check_branch
      %11 = sbr.rel (0) target = $region5
    $region4: #{tpu_custom_call.1} parent=1 // pred_region
      _
    $region5: #{tpu_custom_call.1} parent=1 // pred_fallthru
      _
    // Predicated region
    $region6: #{tpu_custom_call.1} parent=1 // pred_check
      _
    $region7: #{tpu_custom_call.1} parent=1 // pred_check_branch
      %13 = sbr.rel (0) target = $region9
    $region8: #{tpu_custom_call.1} parent=1 // pred_region
      _
    $region9: #{tpu_custom_call.1} parent=1 // pred_fallthru
      _
    // Predicated region
    $region10: #{tpu_custom_call.1} parent=1 // pred_check
      _
    $region11: #{tpu_custom_call.1} parent=1 // pred_check_branch
      %15 = sbr.rel (0) target = $region13
    $region12: #{tpu_custom_call.1} parent=1 // pred_region
      _
    $region13: #{tpu_custom_call.1} parent=1 // pred_fallthru
      _
    // Predicated region
    $region14: #{tpu_custom_call.1} parent=1 // pred_check
      _
    $region15: #{tpu_custom_call.1} parent=1 // pred_check_branch
      %17 = sbr.rel (0) target = $region17
    $region16: #{tpu_custom_call.1} parent=1 // pred_region
      _
    $region17: #{tpu_custom_call.1} parent=1 // pred_fallthru
      _
    %v18 = vld [vmem:[%s1] sm:$0x1]
    %v19 = vld [vmem:[%s2] sm:$0x1]
    %v20 = vld [vmem:[%s3] sm:$0xff]
    %v21 = vld [vmem:[%s3 + $0x8] sm:$0xff]
    %v22 = vld [vmem:[%s3 + $0x10] sm:$0xff]
    %v23 = vld [vmem:[%s3 + $0x18] sm:$0xff]
    %v24 = vld [vmem:[%s3 + $0x20] sm:$0xff]
    %v25 = vld [vmem:[%s3 + $0x28] sm:$0xff]
    %v26 = vld [vmem:[%s3 + $0x30] sm:$0xff]
    %v27 = vld [vmem:[%s3 + $0x38] sm:$0xff]
    %v28 = vld [vmem:[%s3 + $0x40] sm:$0xff]
    %v29 = vld [vmem:[%s3 + $0x48] sm:$0xff]
    %v30 = vld [vmem:[%s3 + $0x50] sm:$0xff]
    %v31 = vld [vmem:[%s3 + $0x58] sm:$0xff]
    %v32 = vld [vmem:[%s3 + $0x60] sm:$0xff]
    %v33 = vld [vmem:[%s3 + $0x68] sm:$0xff]
    %v34 = vld [vmem:[%s3 + $0x70] sm:$0xff]
    %v35 = vld [vmem:[%s3 + $0x78] sm:$0xff]
    %v36 = vld [vmem:[%s0] sm:$0xff]
    %38 = vset.pattern.permute.xlu0 0
    %39 = vperm.xlu0 %38, %v36
    %v40 = vpop.permute.xlu0 %39
    %v43 = vlaneseq
    %v44 = vshrl.u32 %v43, 7
    %v45 = vsub.s32 0, %v44
    %v46 = vrot.slane %v18, %v45
    %v48 = vmul.f32 %v40, %v46
    %v50 = vlaneseq
    %v51 = vshrl.u32 %v50, 7
    %v52 = vsub.s32 0, %v51
    %v53 = vrot.slane %v19, %v52
    %v55 = vadd.f32 %v48, %v53
    %v56 = vand.u32 2147483647, %v55
    %vm57 = vcmp.le.f32.partialorder %v56, 0.7853982
    %vm58 = vcmp.lt.s32.totalorder %v55, 0
    %v59 = vand.u32 %v55, 2139095040
    %v60 = vshrl.u32 %v59, 23
    %v61 = vsub.s32 %v60, 127
    %v62 = vand.u32 2147483647, %v55
    %v63 = vand.u32 %v62, 8388607
    %v64 = vor.u32 %v63, 8388608
    %v65 = vsub.s32 0, %v64
    %v66 = vadd.s32 %v61, 1
    %vm67 = vcmp.gt.s32.totalorder %v66, 0
    %v68 = vsel %vm67, %v66, 0
    %v69 = vshrl.u32 %v68, 5
    %v70 = vand.u32 %v68, 31
    %v71 = vsub.s32 32, %v70
    %v72 = vshrl.u32 683565275, %v71
    %v73 = vshll.u32 683565275, %v70
    %v74 = vshrl.u32 2475754826, %v71
    %v75 = vor.u32 %v73, %v74
    %v76 = vshll.u32 2475754826, %v70
    %v77 = vshrl.u32 2131351028, %v71
    %v78 = vor.u32 %v76, %v77
    %v79 = vshll.u32 2131351028, %v70
    %v80 = vshrl.u32 2102212464, %v71
    %v81 = vor.u32 %v79, %v80
    %v82 = vshll.u32 2102212464, %v70
    %v83 = vshrl.u32 920167782, %v71
    %v84 = vor.u32 %v82, %v83
    %v85 = vshll.u32 920167782, %v70
    %v86 = vshrl.u32 1326507024, %v71
    %v87 = vor.u32 %v85, %v86
    %vm88 = vcmp.lt.s32.totalorder %v69, 1
    %vm89 = vcmp.lt.s32.totalorder %v69, 2
    %vm90 = vcmp.lt.s32.totalorder %v69, 3
    %vm91 = vcmp.lt.s32.totalorder %v69, 4
    %v92 = vsel %vm88, %v72, %v75
    %v93 = vsel %vm91, %v81, 2102212464
    %v94 = vsel %vm90, %v78, %v93
    %v95 = vsel %vm89, %v92, %v94
    %v96 = vsel %vm88, %v75, %v78
    %v97 = vsel %vm91, %v84, 920167782
    %v98 = vsel %vm90, %v81, %v97
    %v99 = vsel %vm89, %v96, %v98
    %v100 = vsel %vm88, %v78, %v81
    %v101 = vsel %vm91, %v87, 1326507024
    %v102 = vsel %vm90, %v84, %v101
    %v103 = vsel %vm89, %v100, %v102
    %v104 = vshll.u32 %v64, 8
    %v105 = vmul.u32.u64.compose %v104, %v103
    %v106 = vextract.low.u32 %v105
    %v107 = vextract.high.u32 %v105
    %v108 = vmul.u32.u64.compose %v104, %v99
    %v109 = vextract.low.u32 %v108
    %v110 = vextract.high.u32 %v108
    %v111 = vmul.u32 %v104, %v95
    %v112 = vadd.s32 %v107, %v109
    %vm113 = vc.u32 %v107, %v109
    %v114 = vadd.s32 %v110, 1
    %v115 = vsel %vm113, %v114, %v110
    %v116 = vadd.s32 %v111, %v115
    %v117 = vadd.s32 %v116, 536870912
    %v118 = vshrl.u32 %v117, 30
    %v119 = vshll.u32 %v118, 30
    %v120 = vsub.s32 %v116, %v119
    %vm121 = vcmp.lt.s32.totalorder %v120, 0
    %v122 = vsub.s32 0, %v120
    %v123 = vsel %vm121, %v122, %v120
    %v124 = vclz %v123
    %v125 = vsub.s32 %v124, 2
    %vm126 = vcmp.gt.s32.totalorder 0, %v125
    %v127 = vsel %vm126, 0, %v125
    %v128 = vsub.s32 32, %v127
    %v129 = vshll.u32 %v120, %v127
    %v130 = vshrl.u32 %v112, %v128
    %v131 = vor.u32 %v129, %v130
    %v132 = vsub.s32 4294967266, %v127
    %v133 = vadd.s32 %v132, 127
    %v134 = vshll.u32 %v133, 23
    %v135 = vor.u32 4788187, %v134
    %v136 = vand.u32 2147483647, %v135
    %v138 = vcvt.s32.f32 %v131
    %v139 = vmul.f32 %v138, %v136
    %v140 = vxor.u32 %v139, 2147483648
    %v141 = vsel %vm58, %v140, %v139
    %v142 = vsub.s32 4, %v118
    %v143 = vsel %vm58, %v142, %v118
    %v144 = vsel %vm57, %v55, %v141
    %v145 = vsel %vm57, 0, %v143
    %v146 = vcosq.f32.pop %v144
    %v147 = vsinq.f32.pop %v144
    %vm148 = vweird.f32 %v55
    %v149 = vand.u32 %v145, 3
    %vm150 = vcmp.lt.s32.totalorder %v149, 2
    %vm151 = vcmp.eq.s32.totalorder %v149, 0
    %v152 = vxor.u32 %v147, 2147483648
    %v153 = vsel %vm151, %v146, %v152
    %vm154 = vcmp.eq.s32.totalorder %v149, 2
    %v155 = vxor.u32 %v146, 2147483648
    %v156 = vsel %vm154, %v155, %v147
    %v157 = vsel %vm150, %v153, %v156
    %v158 = vsel %vm148, nan, %v157
    %159 = vmatprep.subr.mxu0 0.0
    %160 = vmatpush1.msra.mxu0 %v20
    %161 = vmatprep.subr.mxu0 0.0
    %162 = vmatpush1.msra.mxu0 %v21
    %163 = vmatprep.subr.mxu0 0.0
    %164 = vmatpush1.msra.mxu0 %v22
    %165 = vmatprep.subr.mxu0 0.0
    %166 = vmatpush1.msra.mxu0 %v23
    %167 = vmatprep.subr.mxu0 0.0
    %168 = vmatpush1.msra.mxu0 %v24
    %169 = vmatprep.subr.mxu0 0.0
    %170 = vmatpush1.msra.mxu0 %v25
    %171 = vmatprep.subr.mxu0 0.0
    %172 = vmatpush1.msra.mxu0 %v26
    %173 = vmatprep.subr.mxu0 0.0
    %174 = vmatpush1.msra.mxu0 %v27
    %175 = vmatprep.subr.mxu0 0.0
    %176 = vmatpush1.msra.mxu0 %v28
    %177 = vmatprep.subr.mxu0 0.0
    %178 = vmatpush1.msra.mxu0 %v29
    %179 = vmatprep.subr.mxu0 0.0
    %180 = vmatpush1.msra.mxu0 %v30
    %181 = vmatprep.subr.mxu0 0.0
    %182 = vmatpush1.msra.mxu0 %v31
    %183 = vmatprep.subr.mxu0 0.0
    %184 = vmatpush1.msra.mxu0 %v32
    %185 = vmatprep.subr.mxu0 0.0
    %186 = vmatpush1.msra.mxu0 %v33
    %187 = vmatprep.subr.mxu0 0.0
    %188 = vmatpush1.msra.mxu0 %v34
    %189 = vmatprep.subr.mxu0 0.0
    %190 = vmatpush1.msra.mxu0 %v35
    %191 = vmatprep.subr.mxu0 0.0
    %192 = vmatpush1.msra.mxu0 0.0
    %193 = vmatprep.subr.mxu0 0.0
    %194 = vmatpush1.msra.mxu0 0.0
    %195 = vmatprep.subr.mxu0 0.0
    %196 = vmatpush1.msra.mxu0 0.0
    %197 = vmatprep.subr.mxu0 0.0
    %198 = vmatpush1.msra.mxu0 0.0
    %199 = vmatprep.subr.mxu0 0.0
    %200 = vmatpush1.msra.mxu0 0.0
    %201 = vmatprep.subr.mxu0 0.0
    %202 = vmatpush1.msra.mxu0 0.0
    %203 = vmatprep.subr.mxu0 0.0
    %204 = vmatpush1.msra.mxu0 0.0
    %205 = vmatprep.subr.mxu0 0.0
    %206 = vmatpush1.msra.mxu0 0.0
    %207 = vmatprep.subr.mxu0 0.0
    %208 = vmatpush1.msra.mxu0 0.0
    %209 = vmatprep.subr.mxu0 0.0
    %210 = vmatpush1.msra.mxu0 0.0
    %211 = vmatprep.subr.mxu0 0.0
    %212 = vmatpush1.msra.mxu0 0.0
    %213 = vmatprep.subr.mxu0 0.0
    %214 = vmatpush1.msra.mxu0 0.0
    %215 = vmatprep.subr.mxu0 0.0
    %216 = vmatpush1.msra.mxu0 0.0
    %217 = vmatprep.subr.mxu0 0.0
    %218 = vmatpush1.msra.mxu0 0.0
    %219 = vmatprep.subr.mxu0 0.0
    %220 = vmatpush1.msra.mxu0 0.0
    %221 = vmatprep.subr.mxu0 0.0
    %222 = vmatpush1.msra.mxu0 0.0
    %223 = vmatprep.mubr.f32.mxu0 0.0
    %224 = vmatmul.mubr.f32.gmra.mrb[0].mxu0 %v158
    %v225 = vpop.f32.mrb[0].mxu0
    %v226 = vadd.f32 0.0, %v225
    %v227 = vpop.f32.mrb[0].mxu0
    %228 = vdwg.mxu0
    %v229 = vmax.f32 %v226, 0.0
    %vm230 = vcmask 523264
    %231 = vst.msk [vmem:[#allocation2] sm:$0xff] %vm230, %v229
    %232 = vset.pattern.permute.xlu0 1
    %233 = vperm.xlu0 %232, %v36
    %v234 = vpop.permute.xlu0 %233
    %v236 = vmul.f32 %v234, %v46
    %v237 = vadd.f32 %v236, %v53
    %v238 = vand.u32 2147483647, %v237
    %vm239 = vcmp.le.f32.partialorder %v238, 0.7853982
    %vm240 = vcmp.lt.s32.totalorder %v237, 0
    %v241 = vand.u32 %v237, 2139095040
    %v242 = vshrl.u32 %v241, 23
    %v243 = vsub.s32 %v242, 127
    %v244 = vand.u32 2147483647, %v237
    %v245 = vand.u32 %v244, 8388607
    %v246 = vor.u32 %v245, 8388608
    %v247 = vsub.s32 0, %v246
    %v248 = vadd.s32 %v243, 1
    %vm249 = vcmp.gt.s32.totalorder %v248, 0
    %v250 = vsel %vm249, %v248, 0
    %v251 = vshrl.u32 %v250, 5
    %v252 = vand.u32 %v250, 31
    %v253 = vsub.s32 32, %v252
    %v254 = vshrl.u32 683565275, %v253
    %v255 = vshll.u32 683565275, %v252
    %v256 = vshrl.u32 2475754826, %v253
    %v257 = vor.u32 %v255, %v256
    %v258 = vshll.u32 2475754826, %v252
    %v259 = vshrl.u32 2131351028, %v253
    %v260 = vor.u32 %v258, %v259
    %v261 = vshll.u32 2131351028, %v252
    %v262 = vshrl.u32 2102212464, %v253
    %v263 = vor.u32 %v261, %v262
    %v264 = vshll.u32 2102212464, %v252
    %v265 = vshrl.u32 920167782, %v253
    %v266 = vor.u32 %v264, %v265
    %v267 = vshll.u32 920167782, %v252
    %v268 = vshrl.u32 1326507024, %v253
    %v269 = vor.u32 %v267, %v268
    %vm270 = vcmp.lt.s32.totalorder %v251, 1
    %vm271 = vcmp.lt.s32.totalorder %v251, 2
    %vm272 = vcmp.lt.s32.totalorder %v251, 3
    %vm273 = vcmp.lt.s32.totalorder %v251, 4
    %v274 = vsel %vm270, %v254, %v257
    %v275 = vsel %vm273, %v263, 2102212464
    %v276 = vsel %vm272, %v260, %v275
    %v277 = vsel %vm271, %v274, %v276
    %v278 = vsel %vm270, %v257, %v260
    %v279 = vsel %vm273, %v266, 920167782
    %v280 = vsel %vm272, %v263, %v279
    %v281 = vsel %vm271, %v278, %v280
    %v282 = vsel %vm270, %v260, %v263
    %v283 = vsel %vm273, %v269, 1326507024
    %v284 = vsel %vm272, %v266, %v283
    %v285 = vsel %vm271, %v282, %v284
    %v286 = vshll.u32 %v246, 8
    %v287 = vmul.u32.u64.compose %v286, %v285
    %v288 = vextract.low.u32 %v287
    %v289 = vextract.high.u32 %v287
    %v290 = vmul.u32.u64.compose %v286, %v281
    %v291 = vextract.low.u32 %v290
    %v292 = vextract.high.u32 %v290
    %v293 = vmul.u32 %v286, %v277
    %v294 = vadd.s32 %v289, %v291
    %vm295 = vc.u32 %v289, %v291
    %v296 = vadd.s32 %v292, 1
    %v297 = vsel %vm295, %v296, %v292
    %v298 = vadd.s32 %v293, %v297
    %v299 = vadd.s32 %v298, 536870912
    %v300 = vshrl.u32 %v299, 30
    %v301 = vshll.u32 %v300, 30
    %v302 = vsub.s32 %v298, %v301
    %vm303 = vcmp.lt.s32.totalorder %v302, 0
    %v304 = vsub.s32 0, %v302
    %v305 = vsel %vm303, %v304, %v302
    %v306 = vclz %v305
    %v307 = vsub.s32 %v306, 2
    %vm308 = vcmp.gt.s32.totalorder 0, %v307
    %v309 = vsel %vm308, 0, %v307
    %v310 = vsub.s32 32, %v309
    %v311 = vshll.u32 %v302, %v309
    %v312 = vshrl.u32 %v294, %v310
    %v313 = vor.u32 %v311, %v312
    %v314 = vsub.s32 4294967266, %v309
    %v315 = vadd.s32 %v314, 127
    %v316 = vshll.u32 %v315, 23
    %v317 = vor.u32 4788187, %v316
    %v318 = vand.u32 2147483647, %v317
    %v320 = vcvt.s32.f32 %v313
    %v321 = vmul.f32 %v320, %v318
    %v322 = vxor.u32 %v321, 2147483648
    %v323 = vsel %vm240, %v322, %v321
    %v324 = vsub.s32 4, %v300
    %v325 = vsel %vm240, %v324, %v300
    %v326 = vsel %vm239, %v237, %v323
    %v327 = vsel %vm239, 0, %v325
    %v328 = vcosq.f32.pop %v326
    %v329 = vsinq.f32.pop %v326
    %vm330 = vweird.f32 %v237
    %v331 = vand.u32 %v327, 3
    %vm332 = vcmp.lt.s32.totalorder %v331, 2
    %vm333 = vcmp.eq.s32.totalorder %v331, 0
    %v334 = vxor.u32 %v329, 2147483648
    %v335 = vsel %vm333, %v328, %v334
    %vm336 = vcmp.eq.s32.totalorder %v331, 2
    %v337 = vxor.u32 %v328, 2147483648
    %v338 = vsel %vm336, %v337, %v329
    %v339 = vsel %vm332, %v335, %v338
    %v340 = vsel %vm330, nan, %v339
    %341 = vmatprep.subr.mxu0 0.0
    %342 = vmatpush1.msra.mxu0 %v20
    %343 = vmatprep.subr.mxu0 0.0
    %344 = vmatpush1.msra.mxu0 %v21
    %345 = vmatprep.subr.mxu0 0.0
    %346 = vmatpush1.msra.mxu0 %v22
    %347 = vmatprep.subr.mxu0 0.0
    %348 = vmatpush1.msra.mxu0 %v23
    %349 = vmatprep.subr.mxu0 0.0
    %350 = vmatpush1.msra.mxu0 %v24
    %351 = vmatprep.subr.mxu0 0.0
    %352 = vmatpush1.msra.mxu0 %v25
    %353 = vmatprep.subr.mxu0 0.0
    %354 = vmatpush1.msra.mxu0 %v26
    %355 = vmatprep.subr.mxu0 0.0
    %356 = vmatpush1.msra.mxu0 %v27
    %357 = vmatprep.subr.mxu0 0.0
    %358 = vmatpush1.msra.mxu0 %v28
    %359 = vmatprep.subr.mxu0 0.0
    %360 = vmatpush1.msra.mxu0 %v29
    %361 = vmatprep.subr.mxu0 0.0
    %362 = vmatpush1.msra.mxu0 %v30
    %363 = vmatprep.subr.mxu0 0.0
    %364 = vmatpush1.msra.mxu0 %v31
    %365 = vmatprep.subr.mxu0 0.0
    %366 = vmatpush1.msra.mxu0 %v32
    %367 = vmatprep.subr.mxu0 0.0
    %368 = vmatpush1.msra.mxu0 %v33
    %369 = vmatprep.subr.mxu0 0.0
    %370 = vmatpush1.msra.mxu0 %v34
    %371 = vmatprep.subr.mxu0 0.0
    %372 = vmatpush1.msra.mxu0 %v35
    %373 = vmatprep.subr.mxu0 0.0
    %374 = vmatpush1.msra.mxu0 0.0
    %375 = vmatprep.subr.mxu0 0.0
    %376 = vmatpush1.msra.mxu0 0.0
    %377 = vmatprep.subr.mxu0 0.0
    %378 = vmatpush1.msra.mxu0 0.0
    %379 = vmatprep.subr.mxu0 0.0
    %380 = vmatpush1.msra.mxu0 0.0
    %381 = vmatprep.subr.mxu0 0.0
    %382 = vmatpush1.msra.mxu0 0.0
    %383 = vmatprep.subr.mxu0 0.0
    %384 = vmatpush1.msra.mxu0 0.0
    %385 = vmatprep.subr.mxu0 0.0
    %386 = vmatpush1.msra.mxu0 0.0
    %387 = vmatprep.subr.mxu0 0.0
    %388 = vmatpush1.msra.mxu0 0.0
    %389 = vmatprep.subr.mxu0 0.0
    %390 = vmatpush1.msra.mxu0 0.0
    %391 = vmatprep.subr.mxu0 0.0
    %392 = vmatpush1.msra.mxu0 0.0
    %393 = vmatprep.subr.mxu0 0.0
    %394 = vmatpush1.msra.mxu0 0.0
    %395 = vmatprep.subr.mxu0 0.0
    %396 = vmatpush1.msra.mxu0 0.0
    %397 = vmatprep.subr.mxu0 0.0
    %398 = vmatpush1.msra.mxu0 0.0
    %399 = vmatprep.subr.mxu0 0.0
    %400 = vmatpush1.msra.mxu0 0.0
    %401 = vmatprep.subr.mxu0 0.0
    %402 = vmatpush1.msra.mxu0 0.0
    %403 = vmatprep.subr.mxu0 0.0
    %404 = vmatpush1.msra.mxu0 0.0
    %405 = vmatprep.mubr.f32.mxu0 0.0
    %406 = vmatmul.mubr.f32.gmra.mrb[0].mxu0 %v340
    %v407 = vpop.f32.mrb[0].mxu0
    %v408 = vadd.f32 0.0, %v407
    %v409 = vpop.f32.mrb[0].mxu0
    %410 = vdwg.mxu0
    %v411 = vmax.f32 %v408, 0.0
    %413 = vrot.lane.b32.xlu0 %v411, 64
    %v414 = vpop.permute.xlu0 %413
    %vm416 = vcmask 1048064
    %417 = vst.msk [vmem:[#allocation2] sm:$0xff] %vm416, %v414
    %418 = vset.pattern.permute.xlu0 2
    %419 = vperm.xlu0 %418, %v36
    %v420 = vpop.permute.xlu0 %419
    %v422 = vmul.f32 %v420, %v46
    %v423 = vadd.f32 %v422, %v53
    %v424 = vand.u32 2147483647, %v423
    %vm425 = vcmp.le.f32.partialorder %v424, 0.7853982
    %vm426 = vcmp.lt.s32.totalorder %v423, 0
    %v427 = vand.u32 %v423, 2139095040
    %v428 = vshrl.u32 %v427, 23
    %v429 = vsub.s32 %v428, 127
    %v430 = vand.u32 2147483647, %v423
    %v431 = vand.u32 %v430, 8388607
    %v432 = vor.u32 %v431, 8388608
    %v433 = vsub.s32 0, %v432
    %v434 = vadd.s32 %v429, 1
    %vm435 = vcmp.gt.s32.totalorder %v434, 0
    %v436 = vsel %vm435, %v434, 0
    %v437 = vshrl.u32 %v436, 5
    %v438 = vand.u32 %v436, 31
    %v439 = vsub.s32 32, %v438
    %v440 = vshrl.u32 683565275, %v439
    %v441 = vshll.u32 683565275, %v438
    %v442 = vshrl.u32 2475754826, %v439
    %v443 = vor.u32 %v441, %v442
    %v444 = vshll.u32 2475754826, %v438
    %v445 = vshrl.u32 2131351028, %v439
    %v446 = vor.u32 %v444, %v445
    %v447 = vshll.u32 2131351028, %v438
    %v448 = vshrl.u32 2102212464, %v439
    %v449 = vor.u32 %v447, %v448
    %v450 = vshll.u32 2102212464, %v438
    %v451 = vshrl.u32 920167782, %v439
    %v452 = vor.u32 %v450, %v451
    %v453 = vshll.u32 920167782, %v438
    %v454 = vshrl.u32 1326507024, %v439
    %v455 = vor.u32 %v453, %v454
    %vm456 = vcmp.lt.s32.totalorder %v437, 1
    %vm457 = vcmp.lt.s32.totalorder %v437, 2
    %vm458 = vcmp.lt.s32.totalorder %v437, 3
    %vm459 = vcmp.lt.s32.totalorder %v437, 4
    %v460 = vsel %vm456, %v440, %v443
    %v461 = vsel %vm459, %v449, 2102212464
    %v462 = vsel %vm458, %v446, %v461
    %v463 = vsel %vm457, %v460, %v462
    %v464 = vsel %vm456, %v443, %v446
    %v465 = vsel %vm459, %v452, 920167782
    %v466 = vsel %vm458, %v449, %v465
    %v467 = vsel %vm457, %v464, %v466
    %v468 = vsel %vm456, %v446, %v449
    %v469 = vsel %vm459, %v455, 1326507024
    %v470 = vsel %vm458, %v452, %v469
    %v471 = vsel %vm457, %v468, %v470
    %v472 = vshll.u32 %v432, 8
    %v473 = vmul.u32.u64.compose %v472, %v471
    %v474 = vextract.low.u32 %v473
    %v475 = vextract.high.u32 %v473
    %v476 = vmul.u32.u64.compose %v472, %v467
    %v477 = vextract.low.u32 %v476
    %v478 = vextract.high.u32 %v476
    %v479 = vmul.u32 %v472, %v463
    %v480 = vadd.s32 %v475, %v477
    %vm481 = vc.u32 %v475, %v477
    %v482 = vadd.s32 %v478, 1
    %v483 = vsel %vm481, %v482, %v478
    %v484 = vadd.s32 %v479, %v483
    %v485 = vadd.s32 %v484, 536870912
    %v486 = vshrl.u32 %v485, 30
    %v487 = vshll.u32 %v486, 30
    %v488 = vsub.s32 %v484, %v487
    %vm489 = vcmp.lt.s32.totalorder %v488, 0
    %v490 = vsub.s32 0, %v488
    %v491 = vsel %vm489, %v490, %v488
    %v492 = vclz %v491
    %v493 = vsub.s32 %v492, 2
    %vm494 = vcmp.gt.s32.totalorder 0, %v493
    %v495 = vsel %vm494, 0, %v493
    %v496 = vsub.s32 32, %v495
    %v497 = vshll.u32 %v488, %v495
    %v498 = vshrl.u32 %v480, %v496
    %v499 = vor.u32 %v497, %v498
    %v500 = vsub.s32 4294967266, %v495
    %v501 = vadd.s32 %v500, 127
    %v502 = vshll.u32 %v501, 23
    %v503 = vor.u32 4788187, %v502
    %v504 = vand.u32 2147483647, %v503
    %v506 = vcvt.s32.f32 %v499
    %v507 = vmul.f32 %v506, %v504
    %v508 = vxor.u32 %v507, 2147483648
    %v509 = vsel %vm426, %v508, %v507
    %v510 = vsub.s32 4, %v486
    %v511 = vsel %vm426, %v510, %v486
    %v512 = vsel %vm425, %v423, %v509
    %v513 = vsel %vm425, 0, %v511
    %v514 = vcosq.f32.pop %v512
    %v515 = vsinq.f32.pop %v512
    %vm516 = vweird.f32 %v423
    %v517 = vand.u32 %v513, 3
    %vm518 = vcmp.lt.s32.totalorder %v517, 2
    %vm519 = vcmp.eq.s32.totalorder %v517, 0
    %v520 = vxor.u32 %v515, 2147483648
    %v521 = vsel %vm519, %v514, %v520
    %vm522 = vcmp.eq.s32.totalorder %v517, 2
    %v523 = vxor.u32 %v514, 2147483648
    %v524 = vsel %vm522, %v523, %v515
    %v525 = vsel %vm518, %v521, %v524
    %v526 = vsel %vm516, nan, %v525
    %527 = vmatprep.subr.mxu0 0.0
    %528 = vmatpush1.msra.mxu0 %v20
    %529 = vmatprep.subr.mxu0 0.0
    %530 = vmatpush1.msra.mxu0 %v21
    %531 = vmatprep.subr.mxu0 0.0
    %532 = vmatpush1.msra.mxu0 %v22
    %533 = vmatprep.subr.mxu0 0.0
    %534 = vmatpush1.msra.mxu0 %v23
    %535 = vmatprep.subr.mxu0 0.0
    %536 = vmatpush1.msra.mxu0 %v24
    %537 = vmatprep.subr.mxu0 0.0
    %538 = vmatpush1.msra.mxu0 %v25
    %539 = vmatprep.subr.mxu0 0.0
    %540 = vmatpush1.msra.mxu0 %v26
    %541 = vmatprep.subr.mxu0 0.0
    %542 = vmatpush1.msra.mxu0 %v27
    %543 = vmatprep.subr.mxu0 0.0
    %544 = vmatpush1.msra.mxu0 %v28
    %545 = vmatprep.subr.mxu0 0.0
    %546 = vmatpush1.msra.mxu0 %v29
    %547 = vmatprep.subr.mxu0 0.0
    %548 = vmatpush1.msra.mxu0 %v30
    %549 = vmatprep.subr.mxu0 0.0
    %550 = vmatpush1.msra.mxu0 %v31
    %551 = vmatprep.subr.mxu0 0.0
    %552 = vmatpush1.msra.mxu0 %v32
    %553 = vmatprep.subr.mxu0 0.0
    %554 = vmatpush1.msra.mxu0 %v33
    %555 = vmatprep.subr.mxu0 0.0
    %556 = vmatpush1.msra.mxu0 %v34
    %557 = vmatprep.subr.mxu0 0.0
    %558 = vmatpush1.msra.mxu0 %v35
    %559 = vmatprep.subr.mxu0 0.0
    %560 = vmatpush1.msra.mxu0 0.0
    %561 = vmatprep.subr.mxu0 0.0
    %562 = vmatpush1.msra.mxu0 0.0
    %563 = vmatprep.subr.mxu0 0.0
    %564 = vmatpush1.msra.mxu0 0.0
    %565 = vmatprep.subr.mxu0 0.0
    %566 = vmatpush1.msra.mxu0 0.0
    %567 = vmatprep.subr.mxu0 0.0
    %568 = vmatpush1.msra.mxu0 0.0
    %569 = vmatprep.subr.mxu0 0.0
    %570 = vmatpush1.msra.mxu0 0.0
    %571 = vmatprep.subr.mxu0 0.0
    %572 = vmatpush1.msra.mxu0 0.0
    %573 = vmatprep.subr.mxu0 0.0
    %574 = vmatpush1.msra.mxu0 0.0
    %575 = vmatprep.subr.mxu0 0.0
    %576 = vmatpush1.msra.mxu0 0.0
    %577 = vmatprep.subr.mxu0 0.0
    %578 = vmatpush1.msra.mxu0 0.0
    %579 = vmatprep.subr.mxu0 0.0
    %580 = vmatpush1.msra.mxu0 0.0
    %581 = vmatprep.subr.mxu0 0.0
    %582 = vmatpush1.msra.mxu0 0.0
    %583 = vmatprep.subr.mxu0 0.0
    %584 = vmatpush1.msra.mxu0 0.0
    %585 = vmatprep.subr.mxu0 0.0
    %586 = vmatpush1.msra.mxu0 0.0
    %587 = vmatprep.subr.mxu0 0.0
    %588 = vmatpush1.msra.mxu0 0.0
    %589 = vmatprep.subr.mxu0 0.0
    %590 = vmatpush1.msra.mxu0 0.0
    %591 = vmatprep.mubr.f32.mxu0 0.0
    %592 = vmatmul.mubr.f32.gmra.mrb[0].mxu0 %v526
    %v593 = vpop.f32.mrb[0].mxu0
    %v594 = vadd.f32 0.0, %v593
    %v595 = vpop.f32.mrb[0].mxu0
    %596 = vdwg.mxu0
    %v597 = vmax.f32 %v594, 0.0
    %598 = vst.msk [vmem:[#allocation2 + $0x8] sm:$0xff] %vm230, %v597
    %599 = vset.pattern.permute.xlu0 3
    %600 = vperm.xlu0 %599, %v36
    %v601 = vpop.permute.xlu0 %600
    %v603 = vmul.f32 %v601, %v46
    %v604 = vadd.f32 %v603, %v53
    %v605 = vand.u32 2147483647, %v604
    %vm606 = vcmp.le.f32.partialorder %v605, 0.7853982
    %vm607 = vcmp.lt.s32.totalorder %v604, 0
    %v608 = vand.u32 %v604, 2139095040
    %v609 = vshrl.u32 %v608, 23
    %v610 = vsub.s32 %v609, 127
    %v611 = vand.u32 2147483647, %v604
    %v612 = vand.u32 %v611, 8388607
    %v613 = vor.u32 %v612, 8388608
    %v614 = vsub.s32 0, %v613
    %v615 = vadd.s32 %v610, 1
    %vm616 = vcmp.gt.s32.totalorder %v615, 0
    %v617 = vsel %vm616, %v615, 0
    %v618 = vshrl.u32 %v617, 5
    %v619 = vand.u32 %v617, 31
    %v620 = vsub.s32 32, %v619
    %v621 = vshrl.u32 683565275, %v620
    %v622 = vshll.u32 683565275, %v619
    %v623 = vshrl.u32 2475754826, %v620
    %v624 = vor.u32 %v622, %v623
    %v625 = vshll.u32 2475754826, %v619
    %v626 = vshrl.u32 2131351028, %v620
    %v627 = vor.u32 %v625, %v626
    %v628 = vshll.u32 2131351028, %v619
    %v629 = vshrl.u32 2102212464, %v620
    %v630 = vor.u32 %v628, %v629
    %v631 = vshll.u32 2102212464, %v619
    %v632 = vshrl.u32 920167782, %v620
    %v633 = vor.u32 %v631, %v632
    %v634 = vshll.u32 920167782, %v619
    %v635 = vshrl.u32 1326507024, %v620
    %v636 = vor.u32 %v634, %v635
    %vm637 = vcmp.lt.s32.totalorder %v618, 1
    %vm638 = vcmp.lt.s32.totalorder %v618, 2
    %vm639 = vcmp.lt.s32.totalorder %v618, 3
    %vm640 = vcmp.lt.s32.totalorder %v618, 4
    %v641 = vsel %vm637, %v621, %v624
    %v642 = vsel %vm640, %v630, 2102212464
    %v643 = vsel %vm639, %v627, %v642
    %v644 = vsel %vm638, %v641, %v643
    %v645 = vsel %vm637, %v624, %v627
    %v646 = vsel %vm640, %v633, 920167782
    %v647 = vsel %vm639, %v630, %v646
    %v648 = vsel %vm638, %v645, %v647
    %v649 = vsel %vm637, %v627, %v630
    %v650 = vsel %vm640, %v636, 1326507024
    %v651 = vsel %vm639, %v633, %v650
    %v652 = vsel %vm638, %v649, %v651
    %v653 = vshll.u32 %v613, 8
    %v654 = vmul.u32.u64.compose %v653, %v652
    %v655 = vextract.low.u32 %v654
    %v656 = vextract.high.u32 %v654
    %v657 = vmul.u32.u64.compose %v653, %v648
    %v658 = vextract.low.u32 %v657
    %v659 = vextract.high.u32 %v657
    %v660 = vmul.u32 %v653, %v644
    %v661 = vadd.s32 %v656, %v658
    %vm662 = vc.u32 %v656, %v658
    %v663 = vadd.s32 %v659, 1
    %v664 = vsel %vm662, %v663, %v659
    %v665 = vadd.s32 %v660, %v664
    %v666 = vadd.s32 %v665, 536870912
    %v667 = vshrl.u32 %v666, 30
    %v668 = vshll.u32 %v667, 30
    %v669 = vsub.s32 %v665, %v668
    %vm670 = vcmp.lt.s32.totalorder %v669, 0
    %v671 = vsub.s32 0, %v669
    %v672 = vsel %vm670, %v671, %v669
    %v673 = vclz %v672
    %v674 = vsub.s32 %v673, 2
    %vm675 = vcmp.gt.s32.totalorder 0, %v674
    %v676 = vsel %vm675, 0, %v674
    %v677 = vsub.s32 32, %v676
    %v678 = vshll.u32 %v669, %v676
    %v679 = vshrl.u32 %v661, %v677
    %v680 = vor.u32 %v678, %v679
    %v681 = vsub.s32 4294967266, %v676
    %v682 = vadd.s32 %v681, 127
    %v683 = vshll.u32 %v682, 23
    %v684 = vor.u32 4788187, %v683
    %v685 = vand.u32 2147483647, %v684
    %v687 = vcvt.s32.f32 %v680
    %v688 = vmul.f32 %v687, %v685
    %v689 = vxor.u32 %v688, 2147483648
    %v690 = vsel %vm607, %v689, %v688
    %v691 = vsub.s32 4, %v667
    %v692 = vsel %vm607, %v691, %v667
    %v693 = vsel %vm606, %v604, %v690
    %v694 = vsel %vm606, 0, %v692
    %v695 = vcosq.f32.pop %v693
    %v696 = vsinq.f32.pop %v693
    %vm697 = vweird.f32 %v604
    %v698 = vand.u32 %v694, 3
    %vm699 = vcmp.lt.s32.totalorder %v698, 2
    %vm700 = vcmp.eq.s32.totalorder %v698, 0
    %v701 = vxor.u32 %v696, 2147483648
    %v702 = vsel %vm700, %v695, %v701
    %vm703 = vcmp.eq.s32.totalorder %v698, 2
    %v704 = vxor.u32 %v695, 2147483648
    %v705 = vsel %vm703, %v704, %v696
    %v706 = vsel %vm699, %v702, %v705
    %v707 = vsel %vm697, nan, %v706
    %708 = vmatprep.subr.mxu0 0.0
    %709 = vmatpush1.msra.mxu0 %v20
    %710 = vmatprep.subr.mxu0 0.0
    %711 = vmatpush1.msra.mxu0 %v21
    %712 = vmatprep.subr.mxu0 0.0
    %713 = vmatpush1.msra.mxu0 %v22
    %714 = vmatprep.subr.mxu0 0.0
    %715 = vmatpush1.msra.mxu0 %v23
    %716 = vmatprep.subr.mxu0 0.0
    %717 = vmatpush1.msra.mxu0 %v24
    %718 = vmatprep.subr.mxu0 0.0
    %719 = vmatpush1.msra.mxu0 %v25
    %720 = vmatprep.subr.mxu0 0.0
    %721 = vmatpush1.msra.mxu0 %v26
    %722 = vmatprep.subr.mxu0 0.0
    %723 = vmatpush1.msra.mxu0 %v27
    %724 = vmatprep.subr.mxu0 0.0
    %725 = vmatpush1.msra.mxu0 %v28
    %726 = vmatprep.subr.mxu0 0.0
    %727 = vmatpush1.msra.mxu0 %v29
    %728 = vmatprep.subr.mxu0 0.0
    %729 = vmatpush1.msra.mxu0 %v30
    %730 = vmatprep.subr.mxu0 0.0
    %731 = vmatpush1.msra.mxu0 %v31
    %732 = vmatprep.subr.mxu0 0.0
    %733 = vmatpush1.msra.mxu0 %v32
    %734 = vmatprep.subr.mxu0 0.0
    %735 = vmatpush1.msra.mxu0 %v33
    %736 = vmatprep.subr.mxu0 0.0
    %737 = vmatpush1.msra.mxu0 %v34
    %738 = vmatprep.subr.mxu0 0.0
    %739 = vmatpush1.msra.mxu0 %v35
    %740 = vmatprep.subr.mxu0 0.0
    %741 = vmatpush1.msra.mxu0 0.0
    %742 = vmatprep.subr.mxu0 0.0
    %743 = vmatpush1.msra.mxu0 0.0
    %744 = vmatprep.subr.mxu0 0.0
    %745 = vmatpush1.msra.mxu0 0.0
    %746 = vmatprep.subr.mxu0 0.0
    %747 = vmatpush1.msra.mxu0 0.0
    %748 = vmatprep.subr.mxu0 0.0
    %749 = vmatpush1.msra.mxu0 0.0
    %750 = vmatprep.subr.mxu0 0.0
    %751 = vmatpush1.msra.mxu0 0.0
    %752 = vmatprep.subr.mxu0 0.0
    %753 = vmatpush1.msra.mxu0 0.0
    %754 = vmatprep.subr.mxu0 0.0
    %755 = vmatpush1.msra.mxu0 0.0
    %756 = vmatprep.subr.mxu0 0.0
    %757 = vmatpush1.msra.mxu0 0.0
    %758 = vmatprep.subr.mxu0 0.0
    %759 = vmatpush1.msra.mxu0 0.0
    %760 = vmatprep.subr.mxu0 0.0
    %761 = vmatpush1.msra.mxu0 0.0
    %762 = vmatprep.subr.mxu0 0.0
    %763 = vmatpush1.msra.mxu0 0.0
    %764 = vmatprep.subr.mxu0 0.0
    %765 = vmatpush1.msra.mxu0 0.0
    %766 = vmatprep.subr.mxu0 0.0
    %767 = vmatpush1.msra.mxu0 0.0
    %768 = vmatprep.subr.mxu0 0.0
    %769 = vmatpush1.msra.mxu0 0.0
    %770 = vmatprep.subr.mxu0 0.0
    %771 = vmatpush1.msra.mxu0 0.0
    %772 = vmatprep.mubr.f32.mxu0 0.0
    %773 = vmatmul.mubr.f32.gmra.mrb[0].mxu0 %v707
    %v774 = vpop.f32.mrb[0].mxu0
    %v775 = vadd.f32 0.0, %v774
    %v776 = vpop.f32.mrb[0].mxu0
    %777 = vdwg.mxu0
    %v778 = vmax.f32 %v775, 0.0
    %780 = vrot.lane.b32.xlu0 %v778, 64
    %v781 = vpop.permute.xlu0 %780
    %783 = vst.msk [vmem:[#allocation2 + $0x8] sm:$0xff] %vm416, %v781
    %784 = vset.pattern.permute.xlu0 4
    %785 = vperm.xlu0 %784, %v36
    %v786 = vpop.permute.xlu0 %785
    %v788 = vmul.f32 %v786, %v46
    %v789 = vadd.f32 %v788, %v53
    %v790 = vand.u32 2147483647, %v789
    %vm791 = vcmp.le.f32.partialorder %v790, 0.7853982
    %vm792 = vcmp.lt.s32.totalorder %v789, 0
    %v793 = vand.u32 %v789, 2139095040
    %v794 = vshrl.u32 %v793, 23
    %v795 = vsub.s32 %v794, 127
    %v796 = vand.u32 2147483647, %v789
    %v797 = vand.u32 %v796, 8388607
    %v798 = vor.u32 %v797, 8388608
    %v799 = vsub.s32 0, %v798
    %v800 = vadd.s32 %v795, 1
    %vm801 = vcmp.gt.s32.totalorder %v800, 0
    %v802 = vsel %vm801, %v800, 0
    %v803 = vshrl.u32 %v802, 5
    %v804 = vand.u32 %v802, 31
    %v805 = vsub.s32 32, %v804
    %v806 = vshrl.u32 683565275, %v805
    %v807 = vshll.u32 683565275, %v804
    %v808 = vshrl.u32 2475754826, %v805
    %v809 = vor.u32 %v807, %v808
    %v810 = vshll.u32 2475754826, %v804
    %v811 = vshrl.u32 2131351028, %v805
    %v812 = vor.u32 %v810, %v811
    %v813 = vshll.u32 2131351028, %v804
    %v814 = vshrl.u32 2102212464, %v805
    %v815 = vor.u32 %v813, %v814
    %v816 = vshll.u32 2102212464, %v804
    %v817 = vshrl.u32 920167782, %v805
    %v818 = vor.u32 %v816, %v817
    %v819 = vshll.u32 920167782, %v804
    %v820 = vshrl.u32 1326507024, %v805
    %v821 = vor.u32 %v819, %v820
    %vm822 = vcmp.lt.s32.totalorder %v803, 1
    %vm823 = vcmp.lt.s32.totalorder %v803, 2
    %vm824 = vcmp.lt.s32.totalorder %v803, 3
    %vm825 = vcmp.lt.s32.totalorder %v803, 4
    %v826 = vsel %vm822, %v806, %v809
    %v827 = vsel %vm825, %v815, 2102212464
    %v828 = vsel %vm824, %v812, %v827
    %v829 = vsel %vm823, %v826, %v828
    %v830 = vsel %vm822, %v809, %v812
    %v831 = vsel %vm825, %v818, 920167782
    %v832 = vsel %vm824, %v815, %v831
    %v833 = vsel %vm823, %v830, %v832
    %v834 = vsel %vm822, %v812, %v815
    %v835 = vsel %vm825, %v821, 1326507024
    %v836 = vsel %vm824, %v818, %v835
    %v837 = vsel %vm823, %v834, %v836
    %v838 = vshll.u32 %v798, 8
    %v839 = vmul.u32.u64.compose %v838, %v837
    %v840 = vextract.low.u32 %v839
    %v841 = vextract.high.u32 %v839
    %v842 = vmul.u32.u64.compose %v838, %v833
    %v843 = vextract.low.u32 %v842
    %v844 = vextract.high.u32 %v842
    %v845 = vmul.u32 %v838, %v829
    %v846 = vadd.s32 %v841, %v843
    %vm847 = vc.u32 %v841, %v843
    %v848 = vadd.s32 %v844, 1
    %v849 = vsel %vm847, %v848, %v844
    %v850 = vadd.s32 %v845, %v849
    %v851 = vadd.s32 %v850, 536870912
    %v852 = vshrl.u32 %v851, 30
    %v853 = vshll.u32 %v852, 30
    %v854 = vsub.s32 %v850, %v853
    %vm855 = vcmp.lt.s32.totalorder %v854, 0
    %v856 = vsub.s32 0, %v854
    %v857 = vsel %vm855, %v856, %v854
    %v858 = vclz %v857
    %v859 = vsub.s32 %v858, 2
    %vm860 = vcmp.gt.s32.totalorder 0, %v859
    %v861 = vsel %vm860, 0, %v859
    %v862 = vsub.s32 32, %v861
    %v863 = vshll.u32 %v854, %v861
    %v864 = vshrl.u32 %v846, %v862
    %v865 = vor.u32 %v863, %v864
    %v866 = vsub.s32 4294967266, %v861
    %v867 = vadd.s32 %v866, 127
    %v868 = vshll.u32 %v867, 23
    %v869 = vor.u32 4788187, %v868
    %v870 = vand.u32 2147483647, %v869
    %v872 = vcvt.s32.f32 %v865
    %v873 = vmul.f32 %v872, %v870
    %v874 = vxor.u32 %v873, 2147483648
    %v875 = vsel %vm792, %v874, %v873
    %v876 = vsub.s32 4, %v852
    %v877 = vsel %vm792, %v876, %v852
    %v878 = vsel %vm791, %v789, %v875
    %v879 = vsel %vm791, 0, %v877
    %v880 = vcosq.f32.pop %v878
    %v881 = vsinq.f32.pop %v878
    %vm882 = vweird.f32 %v789
    %v883 = vand.u32 %v879, 3
    %vm884 = vcmp.lt.s32.totalorder %v883, 2
    %vm885 = vcmp.eq.s32.totalorder %v883, 0
    %v886 = vxor.u32 %v881, 2147483648
    %v887 = vsel %vm885, %v880, %v886
    %vm888 = vcmp.eq.s32.totalorder %v883, 2
    %v889 = vxor.u32 %v880, 2147483648
    %v890 = vsel %vm888, %v889, %v881
    %v891 = vsel %vm884, %v887, %v890
    %v892 = vsel %vm882, nan, %v891
    %893 = vmatprep.subr.mxu0 0.0
    %894 = vmatpush1.msra.mxu0 %v20
    %895 = vmatprep.subr.mxu0 0.0
    %896 = vmatpush1.msra.mxu0 %v21
    %897 = vmatprep.subr.mxu0 0.0
    %898 = vmatpush1.msra.mxu0 %v22
    %899 = vmatprep.subr.mxu0 0.0
    %900 = vmatpush1.msra.mxu0 %v23
    %901 = vmatprep.subr.mxu0 0.0
    %902 = vmatpush1.msra.mxu0 %v24
    %903 = vmatprep.subr.mxu0 0.0
    %904 = vmatpush1.msra.mxu0 %v25
    %905 = vmatprep.subr.mxu0 0.0
    %906 = vmatpush1.msra.mxu0 %v26
    %907 = vmatprep.subr.mxu0 0.0
    %908 = vmatpush1.msra.mxu0 %v27
    %909 = vmatprep.subr.mxu0 0.0
    %910 = vmatpush1.msra.mxu0 %v28
    %911 = vmatprep.subr.mxu0 0.0
    %912 = vmatpush1.msra.mxu0 %v29
    %913 = vmatprep.subr.mxu0 0.0
    %914 = vmatpush1.msra.mxu0 %v30
    %915 = vmatprep.subr.mxu0 0.0
    %916 = vmatpush1.msra.mxu0 %v31
    %917 = vmatprep.subr.mxu0 0.0
    %918 = vmatpush1.msra.mxu0 %v32
    %919 = vmatprep.subr.mxu0 0.0
    %920 = vmatpush1.msra.mxu0 %v33
    %921 = vmatprep.subr.mxu0 0.0
    %922 = vmatpush1.msra.mxu0 %v34
    %923 = vmatprep.subr.mxu0 0.0
    %924 = vmatpush1.msra.mxu0 %v35
    %925 = vmatprep.subr.mxu0 0.0
    %926 = vmatpush1.msra.mxu0 0.0
    %927 = vmatprep.subr.mxu0 0.0
    %928 = vmatpush1.msra.mxu0 0.0
    %929 = vmatprep.subr.mxu0 0.0
    %930 = vmatpush1.msra.mxu0 0.0
    %931 = vmatprep.subr.mxu0 0.0
    %932 = vmatpush1.msra.mxu0 0.0
    %933 = vmatprep.subr.mxu0 0.0
    %934 = vmatpush1.msra.mxu0 0.0
    %935 = vmatprep.subr.mxu0 0.0
    %936 = vmatpush1.msra.mxu0 0.0
    %937 = vmatprep.subr.mxu0 0.0
    %938 = vmatpush1.msra.mxu0 0.0
    %939 = vmatprep.subr.mxu0 0.0
    %940 = vmatpush1.msra.mxu0 0.0
    %941 = vmatprep.subr.mxu0 0.0
    %942 = vmatpush1.msra.mxu0 0.0
    %943 = vmatprep.subr.mxu0 0.0
    %944 = vmatpush1.msra.mxu0 0.0
    %945 = vmatprep.subr.mxu0 0.0
    %946 = vmatpush1.msra.mxu0 0.0
    %947 = vmatprep.subr.mxu0 0.0
    %948 = vmatpush1.msra.mxu0 0.0
    %949 = vmatprep.subr.mxu0 0.0
    %950 = vmatpush1.msra.mxu0 0.0
    %951 = vmatprep.subr.mxu0 0.0
    %952 = vmatpush1.msra.mxu0 0.0
    %953 = vmatprep.subr.mxu0 0.0
    %954 = vmatpush1.msra.mxu0 0.0
    %955 = vmatprep.subr.mxu0 0.0
    %956 = vmatpush1.msra.mxu0 0.0
    %957 = vmatprep.mubr.f32.mxu0 0.0
    %958 = vmatmul.mubr.f32.gmra.mrb[0].mxu0 %v892
    %v959 = vpop.f32.mrb[0].mxu0
    %v960 = vadd.f32 0.0, %v959
    %v961 = vpop.f32.mrb[0].mxu0
    %962 = vdwg.mxu0
    %v963 = vmax.f32 %v960, 0.0
    %964 = vst.msk [vmem:[#allocation2 + $0x10] sm:$0xff] %vm230, %v963
    %965 = vset.pattern.permute.xlu0 5
    %966 = vperm.xlu0 %965, %v36
    %v967 = vpop.permute.xlu0 %966
    %v969 = vmul.f32 %v967, %v46
    %v970 = vadd.f32 %v969, %v53
    %v971 = vand.u32 2147483647, %v970
    %vm972 = vcmp.le.f32.partialorder %v971, 0.7853982
    %vm973 = vcmp.lt.s32.totalorder %v970, 0
    %v974 = vand.u32 %v970, 2139095040
    %v975 = vshrl.u32 %v974, 23
    %v976 = vsub.s32 %v975, 127
    %v977 = vand.u32 2147483647, %v970
    %v978 = vand.u32 %v977, 8388607
    %v979 = vor.u32 %v978, 8388608
    %v980 = vsub.s32 0, %v979
    %v981 = vadd.s32 %v976, 1
    %vm982 = vcmp.gt.s32.totalorder %v981, 0
    %v983 = vsel %vm982, %v981, 0
    %v984 = vshrl.u32 %v983, 5
    %v985 = vand.u32 %v983, 31
    %v986 = vsub.s32 32, %v985
    %v987 = vshrl.u32 683565275, %v986
    %v988 = vshll.u32 683565275, %v985
    %v989 = vshrl.u32 2475754826, %v986
    %v990 = vor.u32 %v988, %v989
    %v991 = vshll.u32 2475754826, %v985
    %v992 = vshrl.u32 2131351028, %v986
    %v993 = vor.u32 %v991, %v992
    %v994 = vshll.u32 2131351028, %v985
    %v995 = vshrl.u32 2102212464, %v986
    %v996 = vor.u32 %v994, %v995
    %v997 = vshll.u32 2102212464, %v985
    %v998 = vshrl.u32 920167782, %v986
    %v999 = vor.u32 %v997, %v998
    %v1000 = vshll.u32 920167782, %v985
    %v1001 = vshrl.u32 1326507024, %v986
    %v1002 = vor.u32 %v1000, %v1001
    %vm1003 = vcmp.lt.s32.totalorder %v984, 1
    %vm1004 = vcmp.lt.s32.totalorder %v984, 2
    %vm1005 = vcmp.lt.s32.totalorder %v984, 3
    %vm1006 = vcmp.lt.s32.totalorder %v984, 4
    %v1007 = vsel %vm1003, %v987, %v990
    %v1008 = vsel %vm1006, %v996, 2102212464
    %v1009 = vsel %vm1005, %v993, %v1008
    %v1010 = vsel %vm1004, %v1007, %v1009
    %v1011 = vsel %vm1003, %v990, %v993
    %v1012 = vsel %vm1006, %v999, 920167782
    %v1013 = vsel %vm1005, %v996, %v1012
    %v1014 = vsel %vm1004, %v1011, %v1013
    %v1015 = vsel %vm1003, %v993, %v996
    %v1016 = vsel %vm1006, %v1002, 1326507024
    %v1017 = vsel %vm1005, %v999, %v1016
    %v1018 = vsel %vm1004, %v1015, %v1017
    %v1019 = vshll.u32 %v979, 8
    %v1020 = vmul.u32.u64.compose %v1019, %v1018
    %v1021 = vextract.low.u32 %v1020
    %v1022 = vextract.high.u32 %v1020
    %v1023 = vmul.u32.u64.compose %v1019, %v1014
    %v1024 = vextract.low.u32 %v1023
    %v1025 = vextract.high.u32 %v1023
    %v1026 = vmul.u32 %v1019, %v1010
    %v1027 = vadd.s32 %v1022, %v1024
    %vm1028 = vc.u32 %v1022, %v1024
    %v1029 = vadd.s32 %v1025, 1
    %v1030 = vsel %vm1028, %v1029, %v1025
    %v1031 = vadd.s32 %v1026, %v1030
    %v1032 = vadd.s32 %v1031, 536870912
    %v1033 = vshrl.u32 %v1032, 30
    %v1034 = vshll.u32 %v1033, 30
    %v1035 = vsub.s32 %v1031, %v1034
    %vm1036 = vcmp.lt.s32.totalorder %v1035, 0
    %v1037 = vsub.s32 0, %v1035
    %v1038 = vsel %vm1036, %v1037, %v1035
    %v1039 = vclz %v1038
    %v1040 = vsub.s32 %v1039, 2
    %vm1041 = vcmp.gt.s32.totalorder 0, %v1040
    %v1042 = vsel %vm1041, 0, %v1040
    %v1043 = vsub.s32 32, %v1042
    %v1044 = vshll.u32 %v1035, %v1042
    %v1045 = vshrl.u32 %v1027, %v1043
    %v1046 = vor.u32 %v1044, %v1045
    %v1047 = vsub.s32 4294967266, %v1042
    %v1048 = vadd.s32 %v1047, 127
    %v1049 = vshll.u32 %v1048, 23
    %v1050 = vor.u32 4788187, %v1049
    %v1051 = vand.u32 2147483647, %v1050
    %v1053 = vcvt.s32.f32 %v1046
    %v1054 = vmul.f32 %v1053, %v1051
    %v1055 = vxor.u32 %v1054, 2147483648
    %v1056 = vsel %vm973, %v1055, %v1054
    %v1057 = vsub.s32 4, %v1033
    %v1058 = vsel %vm973, %v1057, %v1033
    %v1059 = vsel %vm972, %v970, %v1056
    %v1060 = vsel %vm972, 0, %v1058
    %v1061 = vcosq.f32.pop %v1059
    %v1062 = vsinq.f32.pop %v1059
    %vm1063 = vweird.f32 %v970
    %v1064 = vand.u32 %v1060, 3
    %vm1065 = vcmp.lt.s32.totalorder %v1064, 2
    %vm1066 = vcmp.eq.s32.totalorder %v1064, 0
    %v1067 = vxor.u32 %v1062, 2147483648
    %v1068 = vsel %vm1066, %v1061, %v1067
    %vm1069 = vcmp.eq.s32.totalorder %v1064, 2
    %v1070 = vxor.u32 %v1061, 2147483648
    %v1071 = vsel %vm1069, %v1070, %v1062
    %v1072 = vsel %vm1065, %v1068, %v1071
    %v1073 = vsel %vm1063, nan, %v1072
    %1074 = vmatprep.subr.mxu0 0.0
    %1075 = vmatpush1.msra.mxu0 %v20
    %1076 = vmatprep.subr.mxu0 0.0
    %1077 = vmatpush1.msra.mxu0 %v21
    %1078 = vmatprep.subr.mxu0 0.0
    %1079 = vmatpush1.msra.mxu0 %v22
    %1080 = vmatprep.subr.mxu0 0.0
    %1081 = vmatpush1.msra.mxu0 %v23
    %1082 = vmatprep.subr.mxu0 0.0
    %1083 = vmatpush1.msra.mxu0 %v24
    %1084 = vmatprep.subr.mxu0 0.0
    %1085 = vmatpush1.msra.mxu0 %v25
    %1086 = vmatprep.subr.mxu0 0.0
    %1087 = vmatpush1.msra.mxu0 %v26
    %1088 = vmatprep.subr.mxu0 0.0
    %1089 = vmatpush1.msra.mxu0 %v27
    %1090 = vmatprep.subr.mxu0 0.0
    %1091 = vmatpush1.msra.mxu0 %v28
    %1092 = vmatprep.subr.mxu0 0.0
    %1093 = vmatpush1.msra.mxu0 %v29
    %1094 = vmatprep.subr.mxu0 0.0
    %1095 = vmatpush1.msra.mxu0 %v30
    %1096 = vmatprep.subr.mxu0 0.0
    %1097 = vmatpush1.msra.mxu0 %v31
    %1098 = vmatprep.subr.mxu0 0.0
    %1099 = vmatpush1.msra.mxu0 %v32
    %1100 = vmatprep.subr.mxu0 0.0
    %1101 = vmatpush1.msra.mxu0 %v33
    %1102 = vmatprep.subr.mxu0 0.0
    %1103 = vmatpush1.msra.mxu0 %v34
    %1104 = vmatprep.subr.mxu0 0.0
    %1105 = vmatpush1.msra.mxu0 %v35
    %1106 = vmatprep.subr.mxu0 0.0
    %1107 = vmatpush1.msra.mxu0 0.0
    %1108 = vmatprep.subr.mxu0 0.0
    %1109 = vmatpush1.msra.mxu0 0.0
    %1110 = vmatprep.subr.mxu0 0.0
    %1111 = vmatpush1.msra.mxu0 0.0
    %1112 = vmatprep.subr.mxu0 0.0
    %1113 = vmatpush1.msra.mxu0 0.0
    %1114 = vmatprep.subr.mxu0 0.0
    %1115 = vmatpush1.msra.mxu0 0.0
    %1116 = vmatprep.subr.mxu0 0.0
    %1117 = vmatpush1.msra.mxu0 0.0
    %1118 = vmatprep.subr.mxu0 0.0
    %1119 = vmatpush1.msra.mxu0 0.0
    %1120 = vmatprep.subr.mxu0 0.0
    %1121 = vmatpush1.msra.mxu0 0.0
    %1122 = vmatprep.subr.mxu0 0.0
    %1123 = vmatpush1.msra.mxu0 0.0
    %1124 = vmatprep.subr.mxu0 0.0
    %1125 = vmatpush1.msra.mxu0 0.0
    %1126 = vmatprep.subr.mxu0 0.0
    %1127 = vmatpush1.msra.mxu0 0.0
    %1128 = vmatprep.subr.mxu0 0.0
    %1129 = vmatpush1.msra.mxu0 0.0
    %1130 = vmatprep.subr.mxu0 0.0
    %1131 = vmatpush1.msra.mxu0 0.0
    %1132 = vmatprep.subr.mxu0 0.0
    %1133 = vmatpush1.msra.mxu0 0.0
    %1134 = vmatprep.subr.mxu0 0.0
    %1135 = vmatpush1.msra.mxu0 0.0
    %1136 = vmatprep.subr.mxu0 0.0
    %1137 = vmatpush1.msra.mxu0 0.0
    %1138 = vmatprep.mubr.f32.mxu0 0.0
    %1139 = vmatmul.mubr.f32.gmra.mrb[0].mxu0 %v1073
    %v1140 = vpop.f32.mrb[0].mxu0
    %v1141 = vadd.f32 0.0, %v1140
    %v1142 = vpop.f32.mrb[0].mxu0
    %1143 = vdwg.mxu0
    %v1144 = vmax.f32 %v1141, 0.0
    %1146 = vrot.lane.b32.xlu0 %v1144, 64
    %v1147 = vpop.permute.xlu0 %1146
    %1149 = vst.msk [vmem:[#allocation2 + $0x10] sm:$0xff] %vm416, %v1147
    %1150 = vset.pattern.permute.xlu0 6
    %1151 = vperm.xlu0 %1150, %v36
    %v1152 = vpop.permute.xlu0 %1151
    %v1154 = vmul.f32 %v1152, %v46
    %v1155 = vadd.f32 %v1154, %v53
    %v1156 = vand.u32 2147483647, %v1155
    %vm1157 = vcmp.le.f32.partialorder %v1156, 0.7853982
    %vm1158 = vcmp.lt.s32.totalorder %v1155, 0
    %v1159 = vand.u32 %v1155, 2139095040
    %v1160 = vshrl.u32 %v1159, 23
    %v1161 = vsub.s32 %v1160, 127
    %v1162 = vand.u32 2147483647, %v1155
    %v1163 = vand.u32 %v1162, 8388607
    %v1164 = vor.u32 %v1163, 8388608
    %v1165 = vsub.s32 0, %v1164
    %v1166 = vadd.s32 %v1161, 1
    %vm1167 = vcmp.gt.s32.totalorder %v1166, 0
    %v1168 = vsel %vm1167, %v1166, 0
    %v1169 = vshrl.u32 %v1168, 5
    %v1170 = vand.u32 %v1168, 31
    %v1171 = vsub.s32 32, %v1170
    %v1172 = vshrl.u32 683565275, %v1171
    %v1173 = vshll.u32 683565275, %v1170
    %v1174 = vshrl.u32 2475754826, %v1171
    %v1175 = vor.u32 %v1173, %v1174
    %v1176 = vshll.u32 2475754826, %v1170
    %v1177 = vshrl.u32 2131351028, %v1171
    %v1178 = vor.u32 %v1176, %v1177
    %v1179 = vshll.u32 2131351028, %v1170
    %v1180 = vshrl.u32 2102212464, %v1171
    %v1181 = vor.u32 %v1179, %v1180
    %v1182 = vshll.u32 2102212464, %v1170
    %v1183 = vshrl.u32 920167782, %v1171
    %v1184 = vor.u32 %v1182, %v1183
    %v1185 = vshll.u32 920167782, %v1170
    %v1186 = vshrl.u32 1326507024, %v1171
    %v1187 = vor.u32 %v1185, %v1186
    %vm1188 = vcmp.lt.s32.totalorder %v1169, 1
    %vm1189 = vcmp.lt.s32.totalorder %v1169, 2
    %vm1190 = vcmp.lt.s32.totalorder %v1169, 3
    %vm1191 = vcmp.lt.s32.totalorder %v1169, 4
    %v1192 = vsel %vm1188, %v1172, %v1175
    %v1193 = vsel %vm1191, %v1181, 2102212464
    %v1194 = vsel %vm1190, %v1178, %v1193
    %v1195 = vsel %vm1189, %v1192, %v1194
    %v1196 = vsel %vm1188, %v1175, %v1178
    %v1197 = vsel %vm1191, %v1184, 920167782
    %v1198 = vsel %vm1190, %v1181, %v1197
    %v1199 = vsel %vm1189, %v1196, %v1198
    %v1200 = vsel %vm1188, %v1178, %v1181
    %v1201 = vsel %vm1191, %v1187, 1326507024
    %v1202 = vsel %vm1190, %v1184, %v1201
    %v1203 = vsel %vm1189, %v1200, %v1202
    %v1204 = vshll.u32 %v1164, 8
    %v1205 = vmul.u32.u64.compose %v1204, %v1203
    %v1206 = vextract.low.u32 %v1205
    %v1207 = vextract.high.u32 %v1205
    %v1208 = vmul.u32.u64.compose %v1204, %v1199
    %v1209 = vextract.low.u32 %v1208
    %v1210 = vextract.high.u32 %v1208
    %v1211 = vmul.u32 %v1204, %v1195
    %v1212 = vadd.s32 %v1207, %v1209
    %vm1213 = vc.u32 %v1207, %v1209
    %v1214 = vadd.s32 %v1210, 1
    %v1215 = vsel %vm1213, %v1214, %v1210
    %v1216 = vadd.s32 %v1211, %v1215
    %v1217 = vadd.s32 %v1216, 536870912
    %v1218 = vshrl.u32 %v1217, 30
    %v1219 = vshll.u32 %v1218, 30
    %v1220 = vsub.s32 %v1216, %v1219
    %vm1221 = vcmp.lt.s32.totalorder %v1220, 0
    %v1222 = vsub.s32 0, %v1220
    %v1223 = vsel %vm1221, %v1222, %v1220
    %v1224 = vclz %v1223
    %v1225 = vsub.s32 %v1224, 2
    %vm1226 = vcmp.gt.s32.totalorder 0, %v1225
    %v1227 = vsel %vm1226, 0, %v1225
    %v1228 = vsub.s32 32, %v1227
    %v1229 = vshll.u32 %v1220, %v1227
    %v1230 = vshrl.u32 %v1212, %v1228
    %v1231 = vor.u32 %v1229, %v1230
    %v1232 = vsub.s32 4294967266, %v1227
    %v1233 = vadd.s32 %v1232, 127
    %v1234 = vshll.u32 %v1233, 23
    %v1235 = vor.u32 4788187, %v1234
    %v1236 = vand.u32 2147483647, %v1235
    %v1238 = vcvt.s32.f32 %v1231
    %v1239 = vmul.f32 %v1238, %v1236
    %v1240 = vxor.u32 %v1239, 2147483648
    %v1241 = vsel %vm1158, %v1240, %v1239
    %v1242 = vsub.s32 4, %v1218
    %v1243 = vsel %vm1158, %v1242, %v1218
    %v1244 = vsel %vm1157, %v1155, %v1241
    %v1245 = vsel %vm1157, 0, %v1243
    %v1246 = vcosq.f32.pop %v1244
    %v1247 = vsinq.f32.pop %v1244
    %vm1248 = vweird.f32 %v1155
    %v1249 = vand.u32 %v1245, 3
    %vm1250 = vcmp.lt.s32.totalorder %v1249, 2
    %vm1251 = vcmp.eq.s32.totalorder %v1249, 0
    %v1252 = vxor.u32 %v1247, 2147483648
    %v1253 = vsel %vm1251, %v1246, %v1252
    %vm1254 = vcmp.eq.s32.totalorder %v1249, 2
    %v1255 = vxor.u32 %v1246, 2147483648
    %v1256 = vsel %vm1254, %v1255, %v1247
    %v1257 = vsel %vm1250, %v1253, %v1256
    %v1258 = vsel %vm1248, nan, %v1257
    %1259 = vmatprep.subr.mxu0 0.0
    %1260 = vmatpush1.msra.mxu0 %v20
    %1261 = vmatprep.subr.mxu0 0.0
    %1262 = vmatpush1.msra.mxu0 %v21
    %1263 = vmatprep.subr.mxu0 0.0
    %1264 = vmatpush1.msra.mxu0 %v22
    %1265 = vmatprep.subr.mxu0 0.0
    %1266 = vmatpush1.msra.mxu0 %v23
    %1267 = vmatprep.subr.mxu0 0.0
    %1268 = vmatpush1.msra.mxu0 %v24
    %1269 = vmatprep.subr.mxu0 0.0
    %1270 = vmatpush1.msra.mxu0 %v25
    %1271 = vmatprep.subr.mxu0 0.0
    %1272 = vmatpush1.msra.mxu0 %v26
    %1273 = vmatprep.subr.mxu0 0.0
    %1274 = vmatpush1.msra.mxu0 %v27
    %1275 = vmatprep.subr.mxu0 0.0
    %1276 = vmatpush1.msra.mxu0 %v28
    %1277 = vmatprep.subr.mxu0 0.0
    %1278 = vmatpush1.msra.mxu0 %v29
    %1279 = vmatprep.subr.mxu0 0.0
    %1280 = vmatpush1.msra.mxu0 %v30
    %1281 = vmatprep.subr.mxu0 0.0
    %1282 = vmatpush1.msra.mxu0 %v31
    %1283 = vmatprep.subr.mxu0 0.0
    %1284 = vmatpush1.msra.mxu0 %v32
    %1285 = vmatprep.subr.mxu0 0.0
    %1286 = vmatpush1.msra.mxu0 %v33
    %1287 = vmatprep.subr.mxu0 0.0
    %1288 = vmatpush1.msra.mxu0 %v34
    %1289 = vmatprep.subr.mxu0 0.0
    %1290 = vmatpush1.msra.mxu0 %v35
    %1291 = vmatprep.subr.mxu0 0.0
    %1292 = vmatpush1.msra.mxu0 0.0
    %1293 = vmatprep.subr.mxu0 0.0
    %1294 = vmatpush1.msra.mxu0 0.0
    %1295 = vmatprep.subr.mxu0 0.0
    %1296 = vmatpush1.msra.mxu0 0.0
    %1297 = vmatprep.subr.mxu0 0.0
    %1298 = vmatpush1.msra.mxu0 0.0
    %1299 = vmatprep.subr.mxu0 0.0
    %1300 = vmatpush1.msra.mxu0 0.0
    %1301 = vmatprep.subr.mxu0 0.0
    %1302 = vmatpush1.msra.mxu0 0.0
    %1303 = vmatprep.subr.mxu0 0.0
    %1304 = vmatpush1.msra.mxu0 0.0
    %1305 = vmatprep.subr.mxu0 0.0
    %1306 = vmatpush1.msra.mxu0 0.0
    %1307 = vmatprep.subr.mxu0 0.0
    %1308 = vmatpush1.msra.mxu0 0.0
    %1309 = vmatprep.subr.mxu0 0.0
    %1310 = vmatpush1.msra.mxu0 0.0
    %1311 = vmatprep.subr.mxu0 0.0
    %1312 = vmatpush1.msra.mxu0 0.0
    %1313 = vmatprep.subr.mxu0 0.0
    %1314 = vmatpush1.msra.mxu0 0.0
    %1315 = vmatprep.subr.mxu0 0.0
    %1316 = vmatpush1.msra.mxu0 0.0
    %1317 = vmatprep.subr.mxu0 0.0
    %1318 = vmatpush1.msra.mxu0 0.0
    %1319 = vmatprep.subr.mxu0 0.0
    %1320 = vmatpush1.msra.mxu0 0.0
    %1321 = vmatprep.subr.mxu0 0.0
    %1322 = vmatpush1.msra.mxu0 0.0
    %1323 = vmatprep.mubr.f32.mxu0 0.0
    %1324 = vmatmul.mubr.f32.gmra.mrb[0].mxu0 %v1258
    %v1325 = vpop.f32.mrb[0].mxu0
    %v1326 = vadd.f32 0.0, %v1325
    %v1327 = vpop.f32.mrb[0].mxu0
    %1328 = vdwg.mxu0
    %v1329 = vmax.f32 %v1326, 0.0
    %1330 = vst.msk [vmem:[#allocation2 + $0x18] sm:$0xff] %vm230, %v1329
    %1331 = vset.pattern.permute.xlu0 7
    %1332 = vperm.xlu0 %1331, %v36
    %v1333 = vpop.permute.xlu0 %1332
    %v1335 = vmul.f32 %v1333, %v46
    %v1336 = vadd.f32 %v1335, %v53
    %v1337 = vand.u32 2147483647, %v1336
    %vm1338 = vcmp.le.f32.partialorder %v1337, 0.7853982
    %vm1339 = vcmp.lt.s32.totalorder %v1336, 0
    %v1340 = vand.u32 %v1336, 2139095040
    %v1341 = vshrl.u32 %v1340, 23
    %v1342 = vsub.s32 %v1341, 127
    %v1343 = vand.u32 2147483647, %v1336
    %v1344 = vand.u32 %v1343, 8388607
    %v1345 = vor.u32 %v1344, 8388608
    %v1346 = vsub.s32 0, %v1345
    %v1347 = vadd.s32 %v1342, 1
    %vm1348 = vcmp.gt.s32.totalorder %v1347, 0
    %v1349 = vsel %vm1348, %v1347, 0
    %v1350 = vshrl.u32 %v1349, 5
    %v1351 = vand.u32 %v1349, 31
    %v1352 = vsub.s32 32, %v1351
    %v1353 = vshrl.u32 683565275, %v1352
    %v1354 = vshll.u32 683565275, %v1351
    %v1355 = vshrl.u32 2475754826, %v1352
    %v1356 = vor.u32 %v1354, %v1355
    %v1357 = vshll.u32 2475754826, %v1351
    %v1358 = vshrl.u32 2131351028, %v1352
    %v1359 = vor.u32 %v1357, %v1358
    %v1360 = vshll.u32 2131351028, %v1351
    %v1361 = vshrl.u32 2102212464, %v1352
    %v1362 = vor.u32 %v1360, %v1361
    %v1363 = vshll.u32 2102212464, %v1351
    %v1364 = vshrl.u32 920167782, %v1352
    %v1365 = vor.u32 %v1363, %v1364
    %v1366 = vshll.u32 920167782, %v1351
    %v1367 = vshrl.u32 1326507024, %v1352
    %v1368 = vor.u32 %v1366, %v1367
    %vm1369 = vcmp.lt.s32.totalorder %v1350, 1
    %vm1370 = vcmp.lt.s32.totalorder %v1350, 2
    %vm1371 = vcmp.lt.s32.totalorder %v1350, 3
    %vm1372 = vcmp.lt.s32.totalorder %v1350, 4
    %v1373 = vsel %vm1369, %v1353, %v1356
    %v1374 = vsel %vm1372, %v1362, 2102212464
    %v1375 = vsel %vm1371, %v1359, %v1374
    %v1376 = vsel %vm1370, %v1373, %v1375
    %v1377 = vsel %vm1369, %v1356, %v1359
    %v1378 = vsel %vm1372, %v1365, 920167782
    %v1379 = vsel %vm1371, %v1362, %v1378
    %v1380 = vsel %vm1370, %v1377, %v1379
    %v1381 = vsel %vm1369, %v1359, %v1362
    %v1382 = vsel %vm1372, %v1368, 1326507024
    %v1383 = vsel %vm1371, %v1365, %v1382
    %v1384 = vsel %vm1370, %v1381, %v1383
    %v1385 = vshll.u32 %v1345, 8
    %v1386 = vmul.u32.u64.compose %v1385, %v1384
    %v1387 = vextract.low.u32 %v1386
    %v1388 = vextract.high.u32 %v1386
    %v1389 = vmul.u32.u64.compose %v1385, %v1380
    %v1390 = vextract.low.u32 %v1389
    %v1391 = vextract.high.u32 %v1389
    %v1392 = vmul.u32 %v1385, %v1376
    %v1393 = vadd.s32 %v1388, %v1390
    %vm1394 = vc.u32 %v1388, %v1390
    %v1395 = vadd.s32 %v1391, 1
    %v1396 = vsel %vm1394, %v1395, %v1391
    %v1397 = vadd.s32 %v1392, %v1396
    %v1398 = vadd.s32 %v1397, 536870912
    %v1399 = vshrl.u32 %v1398, 30
    %v1400 = vshll.u32 %v1399, 30
    %v1401 = vsub.s32 %v1397, %v1400
    %vm1402 = vcmp.lt.s32.totalorder %v1401, 0
    %v1403 = vsub.s32 0, %v1401
    %v1404 = vsel %vm1402, %v1403, %v1401
    %v1405 = vclz %v1404
    %v1406 = vsub.s32 %v1405, 2
    %vm1407 = vcmp.gt.s32.totalorder 0, %v1406
    %v1408 = vsel %vm1407, 0, %v1406
    %v1409 = vsub.s32 32, %v1408
    %v1410 = vshll.u32 %v1401, %v1408
    %v1411 = vshrl.u32 %v1393, %v1409
    %v1412 = vor.u32 %v1410, %v1411
    %v1413 = vsub.s32 4294967266, %v1408
    %v1414 = vadd.s32 %v1413, 127
    %v1415 = vshll.u32 %v1414, 23
    %v1416 = vor.u32 4788187, %v1415
    %v1417 = vand.u32 2147483647, %v1416
    %v1419 = vcvt.s32.f32 %v1412
    %v1420 = vmul.f32 %v1419, %v1417
    %v1421 = vxor.u32 %v1420, 2147483648
    %v1422 = vsel %vm1339, %v1421, %v1420
    %v1423 = vsub.s32 4, %v1399
    %v1424 = vsel %vm1339, %v1423, %v1399
    %v1425 = vsel %vm1338, %v1336, %v1422
    %v1426 = vsel %vm1338, 0, %v1424
    %v1427 = vcosq.f32.pop %v1425
    %v1428 = vsinq.f32.pop %v1425
    %vm1429 = vweird.f32 %v1336
    %v1430 = vand.u32 %v1426, 3
    %vm1431 = vcmp.lt.s32.totalorder %v1430, 2
    %vm1432 = vcmp.eq.s32.totalorder %v1430, 0
    %v1433 = vxor.u32 %v1428, 2147483648
    %v1434 = vsel %vm1432, %v1427, %v1433
    %vm1435 = vcmp.eq.s32.totalorder %v1430, 2
    %v1436 = vxor.u32 %v1427, 2147483648
    %v1437 = vsel %vm1435, %v1436, %v1428
    %v1438 = vsel %vm1431, %v1434, %v1437
    %v1439 = vsel %vm1429, nan, %v1438
    %1440 = vmatprep.subr.mxu0 0.0
    %1441 = vmatpush1.msra.mxu0 %v20
    %1442 = vmatprep.subr.mxu0 0.0
    %1443 = vmatpush1.msra.mxu0 %v21
    %1444 = vmatprep.subr.mxu0 0.0
    %1445 = vmatpush1.msra.mxu0 %v22
    %1446 = vmatprep.subr.mxu0 0.0
    %1447 = vmatpush1.msra.mxu0 %v23
    %1448 = vmatprep.subr.mxu0 0.0
    %1449 = vmatpush1.msra.mxu0 %v24
    %1450 = vmatprep.subr.mxu0 0.0
    %1451 = vmatpush1.msra.mxu0 %v25
    %1452 = vmatprep.subr.mxu0 0.0
    %1453 = vmatpush1.msra.mxu0 %v26
    %1454 = vmatprep.subr.mxu0 0.0
    %1455 = vmatpush1.msra.mxu0 %v27
    %1456 = vmatprep.subr.mxu0 0.0
    %1457 = vmatpush1.msra.mxu0 %v28
    %1458 = vmatprep.subr.mxu0 0.0
    %1459 = vmatpush1.msra.mxu0 %v29
    %1460 = vmatprep.subr.mxu0 0.0
    %1461 = vmatpush1.msra.mxu0 %v30
    %1462 = vmatprep.subr.mxu0 0.0
    %1463 = vmatpush1.msra.mxu0 %v31
    %1464 = vmatprep.subr.mxu0 0.0
    %1465 = vmatpush1.msra.mxu0 %v32
    %1466 = vmatprep.subr.mxu0 0.0
    %1467 = vmatpush1.msra.mxu0 %v33
    %1468 = vmatprep.subr.mxu0 0.0
    %1469 = vmatpush1.msra.mxu0 %v34
    %1470 = vmatprep.subr.mxu0 0.0
    %1471 = vmatpush1.msra.mxu0 %v35
    %1472 = vmatprep.subr.mxu0 0.0
    %1473 = vmatpush1.msra.mxu0 0.0
    %1474 = vmatprep.subr.mxu0 0.0
    %1475 = vmatpush1.msra.mxu0 0.0
    %1476 = vmatprep.subr.mxu0 0.0
    %1477 = vmatpush1.msra.mxu0 0.0
    %1478 = vmatprep.subr.mxu0 0.0
    %1479 = vmatpush1.msra.mxu0 0.0
    %1480 = vmatprep.subr.mxu0 0.0
    %1481 = vmatpush1.msra.mxu0 0.0
    %1482 = vmatprep.subr.mxu0 0.0
    %1483 = vmatpush1.msra.mxu0 0.0
    %1484 = vmatprep.subr.mxu0 0.0
    %1485 = vmatpush1.msra.mxu0 0.0
    %1486 = vmatprep.subr.mxu0 0.0
    %1487 = vmatpush1.msra.mxu0 0.0
    %1488 = vmatprep.subr.mxu0 0.0
    %1489 = vmatpush1.msra.mxu0 0.0
    %1490 = vmatprep.subr.mxu0 0.0
    %1491 = vmatpush1.msra.mxu0 0.0
    %1492 = vmatprep.subr.mxu0 0.0
    %1493 = vmatpush1.msra.mxu0 0.0
    %1494 = vmatprep.subr.mxu0 0.0
    %1495 = vmatpush1.msra.mxu0 0.0
    %1496 = vmatprep.subr.mxu0 0.0
    %1497 = vmatpush1.msra.mxu0 0.0
    %1498 = vmatprep.subr.mxu0 0.0
    %1499 = vmatpush1.msra.mxu0 0.0
    %1500 = vmatprep.subr.mxu0 0.0
    %1501 = vmatpush1.msra.mxu0 0.0
    %1502 = vmatprep.subr.mxu0 0.0
    %1503 = vmatpush1.msra.mxu0 0.0
    %1504 = vmatprep.mubr.f32.mxu0 0.0
    %1505 = vmatmul.mubr.f32.gmra.mrb[0].mxu0 %v1439
    %v1506 = vpop.f32.mrb[0].mxu0
    %v1507 = vadd.f32 0.0, %v1506
    %v1508 = vpop.f32.mrb[0].mxu0
    %1509 = vdwg.mxu0
    %v1510 = vmax.f32 %v1507, 0.0
    %1512 = vrot.lane.b32.xlu0 %v1510, 64
    %v1513 = vpop.permute.xlu0 %1512
    %1515 = vst.msk [vmem:[#allocation2 + $0x18] sm:$0xff] %vm416, %v1513
    // Predicated region
    $region18: #{tpu_custom_call.1} parent=1 // pred_check
      _
    $region19: #{tpu_custom_call.1} parent=1 // pred_check_branch
      %1517 = sbr.rel (0) target = $region21
    $region20: #{tpu_custom_call.1} parent=1 // pred_region
      %s1519 = ssub.s32 512, 512
      %1520 = vsyncadd [#allocation3], %s1519
      %s1522 = sshll.u32 [#allocation2], 4
      %s1523 = int_to_ptr.vmem [resolvable:$true] %s1522
      %1525 = dma.vmem_to_hbm [thread:$0]  %s1523, 512, %s4, [#allocation3]
    $region21: #{tpu_custom_call.1} parent=1 // pred_fallthru
      _
    // Predicated region
    $region22: #{tpu_custom_call.1} parent=1 // pred_check
      _
    $region23: #{tpu_custom_call.1} parent=1 // pred_check_branch
      %1527 = sbr.rel (0) target = $region25
    $region24: #{tpu_custom_call.1} parent=1 // pred_region
      %1528 = dma.done [#allocation3], 512
    $region25: #{tpu_custom_call.1} parent=1 // pred_fallthru
      _
    %1529 = vsyncpa [#allocation3], 1

</llo_original>
